<compile_context>
chip_gen: v6e
topology: v6e:2x2x1
jax: 0.10.0
libtpu: 0.0.40
codegen_flags: <defaults>
</compile_context>

<pallas_src>
import functools

import jax
import jax.numpy as jnp
from jax.experimental import pallas as pl
from jax.experimental.pallas import tpu as pltpu


def _round_up(x, m):
    return ((x + m - 1) // m) * m


# ----------------------------------------------------------------------------
# Fused matmul kernel:  out = [relu]( (A @ B) + bias [+ residual] )
# (BN scale is pre-folded into B's columns by the caller.)
# ----------------------------------------------------------------------------
def _make_fused_mm_kernel(has_residual, relu):
    def kernel(*refs):
        if has_residual:
            a_ref, b_ref, t_ref, r_ref, o_ref, acc_ref = refs
        else:
            a_ref, b_ref, t_ref, o_ref, acc_ref = refs
            r_ref = None

        @pl.when(pl.program_id(2) == 0)
        def _():
            acc_ref[...] = jnp.zeros_like(acc_ref)

        # bf16 x bf16 -> f32 accumulation on the MXU.
        acc_ref[...] += jnp.dot(a_ref[...], b_ref[...],
                                preferred_element_type=jnp.float32)

        @pl.when(pl.program_id(2) == pl.num_programs(2) - 1)
        def _():
            y = acc_ref[...] + t_ref[...]
            if has_residual:
                y = y + r_ref[...].astype(jnp.float32)
            if relu:
                y = jnp.maximum(y, 0.0)
            o_ref[...] = y.astype(o_ref.dtype)

    return kernel


def _fused_matmul(a, b, bias, residual=None, relu=False,
                  out_dtype=jnp.bfloat16):
    """Returns PADDED (M_pad, N_pad) result of [relu]((A @ B) + bias [+ res]).

    a: (M, K)  any float dtype (cast to bf16 for the MXU)
    b: (K, N)  f32 weights with BN scale already folded into the columns
    bias: (N,) f32 epilogue bias
    residual: (M, N) or an already padded/lane-aligned (M_pad, N_pad) array
    Callers slice [:M, :N] when (and only when) they need the tight shape.
    """
    M, K = a.shape
    _, Nc = b.shape

    # Tile sizes: respect (8,128)/bf16 tiling, keep double-buffered VMEM small
    # (worst case ~5 MiB, fine for v5e/v6e/v7x scoped limits).
    TM = min(512, _round_up(M, 16))
    TN = min(512, _round_up(Nc, 128))
    N_pad = _round_up(Nc, TN)
    # If the parallel part of the grid would be (1, 1), split M so both v7x
    # TensorCores get work (one extra ~0.35us grid step on single-TC chips).
    if M >= 32 and _round_up(M, TM) == TM and N_pad == TN:
        TM = _round_up((M + 1) // 2, 16)
    M_pad = _round_up(M, TM)
    # Keep TK at 256 where possible (fills the 256-deep MXU on v6e/v7x); pad K
    # up to a multiple of TK -- zero-padded K contributes nothing.
    TK = min(256, _round_up(K, 128))
    K_pad = _round_up(K, TK)

    bf16 = jnp.bfloat16
    a_p = jnp.pad(a.astype(bf16), ((0, M_pad - M), (0, K_pad - K)))
    b_p = jnp.pad(b.astype(bf16), ((0, K_pad - K), (0, N_pad - Nc)))
    t_p = jnp.pad(bias.astype(jnp.float32).reshape(1, Nc),
                  ((0, 0), (0, N_pad - Nc)))

    in_specs = [
        pl.BlockSpec((TM, TK), lambda i, j, k: (i, k)),
        pl.BlockSpec((TK, TN), lambda i, j, k: (k, j)),
        pl.BlockSpec((1, TN), lambda i, j, k: (0, j)),
    ]
    args = [a_p, b_p, t_p]
    res_bytes = 0
    if residual is not None:
        if residual.shape != (M_pad, N_pad):
            residual = jnp.pad(residual.astype(bf16),
                               ((0, M_pad - residual.shape[0]),
                                (0, N_pad - residual.shape[1])))
        in_specs.append(pl.BlockSpec((TM, TN), lambda i, j, k: (i, j)))
        args.append(residual)
        res_bytes = residual.size * residual.dtype.itemsize

    grid = (M_pad // TM, N_pad // TN, K_pad // TK)

    cost = pl.CostEstimate(
        flops=2 * M_pad * N_pad * K_pad,
        transcendentals=0,
        bytes_accessed=int(a_p.size * 2 + b_p.size * 2 + t_p.size * 4
                           + res_bytes
                           + M_pad * N_pad * jnp.dtype(out_dtype).itemsize))

    out = pl.pallas_call(
        _make_fused_mm_kernel(residual is not None, relu),
        out_shape=jax.ShapeDtypeStruct((M_pad, N_pad), out_dtype),
        grid_spec=pltpu.PrefetchScalarGridSpec(
            num_scalar_prefetch=0,
            grid=grid,
            in_specs=in_specs,
            out_specs=pl.BlockSpec((TM, TN), lambda i, j, k: (i, j)),
            scratch_shapes=[pltpu.VMEM((TM, TN), jnp.float32)],
        ),
        compiler_params=pltpu.CompilerParams(
            dimension_semantics=("parallel", "parallel", "arbitrary"),
            vmem_limit_bytes=64 * 1024 * 1024),
        cost_estimate=cost,
    )(*args)

    return out


# ----------------------------------------------------------------------------
# JAX glue: im2col for 3x3/pad=1 convs, weight reshapes, BN folding.
# ----------------------------------------------------------------------------
def _im2col_3x3(x_nhwc, stride):
    N, H, W, C = x_nhwc.shape
    xp = jnp.pad(x_nhwc, ((0, 0), (1, 1), (1, 1), (0, 0)))
    Ho = (H + 2 - 3) // stride + 1
    Wo = (W + 2 - 3) // stride + 1
    cols = []
    for dh in range(3):
        for dw in range(3):
            cols.append(xp[:, dh:dh + (Ho - 1) * stride + 1:stride,
                           dw:dw + (Wo - 1) * stride + 1:stride, :])
    patches = jnp.concatenate(cols, axis=-1)          # (N, Ho, Wo, 9*C)
    return patches.reshape(N * Ho * Wo, 9 * C), (N, Ho, Wo)


def residual_block_forward(x, params, *, stride=1, use_1x1conv=False,
                           eps=1e-5):
    """x: (N, Cin, H, W) NCHW, returns (N, Cout, Ho, Wo)."""
    N, Cin, H, W = x.shape
    w1, b1 = params["w1"], params["b1"]
    Cout = w1.shape[0]
    if not use_1x1conv and (stride != 1 or Cin != Cout):
        raise ValueError(
            "identity shortcut requires stride == 1 and Cin == Cout; "
            "use use_1x1conv=True otherwise")

    # Single layout pass: NCHW -> NHWC + bf16 (feeds both im2col and the
    # identity shortcut).  NCHW at the module boundary kept for PyTorch
    # parity.  TODO(synk): keep NHWC end-to-end at the model level to drop
    # this transpose and the final one.
    x_nhwc = jnp.transpose(x, (0, 2, 3, 1)).astype(jnp.bfloat16)

    # conv1 + bn1 + relu.  Inference-mode BN folded: scale into the weight
    # columns, shift into the epilogue bias.
    scale1 = params["gamma1"] * jax.lax.rsqrt(params["var1"] + eps)
    bias1 = (b1 - params["mean1"]) * scale1 + params["beta1"]
    p1, (_, Ho, Wo) = _im2col_3x3(x_nhwc, stride)
    w1_mat = (jnp.transpose(w1, (2, 3, 1, 0)).reshape(9 * Cin, Cout)
              * scale1[None, :])
    M1 = N * Ho * Wo
    y1_p = _fused_matmul(p1, w1_mat, bias1, relu=True,
                         out_dtype=jnp.bfloat16)       # padded (M1_pad, Cp)

    # Shortcut path -- emitted in bf16 and kept in its padded lane-aligned
    # layout so it plugs straight into conv2's residual input.
    if use_1x1conv:
        w3, b3 = params["w3"], params["b3"]
        xs = x_nhwc[:, ::stride, ::stride, :].reshape(M1, Cin)
        w3_mat = jnp.transpose(w3, (2, 3, 1, 0)).reshape(Cin, Cout)
        shortcut = _fused_matmul(xs, w3_mat, b3, relu=False,
                                 out_dtype=jnp.bfloat16)
    else:
        shortcut = x_nhwc.reshape(M1, Cin)   # padded inside _fused_matmul

    # conv2 + bn2 + residual add + relu, all fused in one kernel.  The row /
    # channel slices below fuse into the im2col concatenate producer (no
    # standalone HBM pass for them).
    scale2 = params["gamma2"] * jax.lax.rsqrt(params["var2"] + eps)
    bias2 = (params["b2"] - params["mean2"]) * scale2 + params["beta2"]
    y1 = y1_p[:M1, :Cout].reshape(N, Ho, Wo, Cout)
    p2, _ = _im2col_3x3(y1, 1)
    w2_mat = (jnp.transpose(params["w2"], (2, 3, 1, 0)).reshape(9 * Cout, Cout)
              * scale2[None, :])
    out_p = _fused_matmul(p2, w2_mat, bias2, residual=shortcut, relu=True,
                          out_dtype=x.dtype)

    out = out_p[:M1, :Cout].reshape(N, Ho, Wo, Cout)
    return jnp.transpose(out, (0, 3, 1, 2))


# ----------------------------------------------------------------------------
# Pure-JAX reference (same inference-mode BN semantics) for verification.
# ----------------------------------------------------------------------------
def _reference_forward(x, params, *, stride, use_1x1conv, eps=1e-5):
    hi = jax.lax.Precision.HIGHEST

    def conv(z, w, b, s, pad):
        y = jax.lax.conv_general_dilated(
            z, w, window_strides=(s, s), padding=pad,
            dimension_numbers=("NCHW", "OIHW", "NCHW"), precision=hi)
        return y + b.reshape(1, -1, 1, 1)

    def bn(y, g, bta, m, v):
        return (g.reshape(1, -1, 1, 1)
                * (y - m.reshape(1, -1, 1, 1))
                * jax.lax.rsqrt(v.reshape(1, -1, 1, 1) + eps)
                + bta.reshape(1, -1, 1, 1))

    y = jax.nn.relu(bn(conv(x, params["w1"], params["b1"], stride,
                            [(1, 1), (1, 1)]),
                       params["gamma1"], params["beta1"],
                       params["mean1"], params["var1"]))
    y = bn(conv(y, params["w2"], params["b2"], 1, [(1, 1), (1, 1)]),
           params["gamma2"], params["beta2"],
           params["mean2"], params["var2"])
    sc = (conv(x, params["w3"], params["b3"], stride, [(0, 0), (0, 0)])
          if use_1x1conv else x)
    return jax.nn.relu(sc + y)


def _init_params(key, cin, cout, use_1x1conv):
    ks = jax.random.split(key, 16)
    p = dict(
        w1=0.1 * jax.random.normal(ks[0], (cout, cin, 3, 3), jnp.float32),
        b1=0.1 * jax.random.normal(ks[1], (cout,), jnp.float32),
        gamma1=1.0 + 0.1 * jax.random.normal(ks[2], (cout,), jnp.float32),
        beta1=0.1 * jax.random.normal(ks[3], (cout,), jnp.float32),
        mean1=0.1 * jax.random.normal(ks[4], (cout,), jnp.float32),
        var1=jax.random.uniform(ks[5], (cout,), jnp.float32, 0.5, 1.5),
        w2=0.1 * jax.random.normal(ks[6], (cout, cout, 3, 3), jnp.float32),
        b2=0.1 * jax.random.normal(ks[7], (cout,), jnp.float32),
        gamma2=1.0 + 0.1 * jax.random.normal(ks[8], (cout,), jnp.float32),
        beta2=0.1 * jax.random.normal(ks[9], (cout,), jnp.float32),
        mean2=0.1 * jax.random.normal(ks[10], (cout,), jnp.float32),
        var2=jax.random.uniform(ks[11], (cout,), jnp.float32, 0.5, 1.5),
    )
    if use_1x1conv:
        p["w3"] = 0.1 * jax.random.normal(ks[12], (cout, cin, 1, 1), jnp.float32)
        p["b3"] = 0.1 * jax.random.normal(ks[13], (cout,), jnp.float32)
    return p


if __name__ == "__main__":
    key = jax.random.PRNGKey(0)
    k_x, k_p1, k_p2 = jax.random.split(key, 3)

    # Case 1: downsampling block with 1x1 shortcut conv (in=4 -> out=8, stride=2).
    x = jax.random.normal(k_x, (2, 4, 16, 16), dtype=jnp.float32)
    params1 = _init_params(k_p1, 4, 8, use_1x1conv=True)
    fwd1 = jax.jit(functools.partial(residual_block_forward,
                                     stride=2, use_1x1conv=True))
    y1 = jax.block_until_ready(fwd1(x, params1))
    ref1 = _reference_forward(x, params1, stride=2, use_1x1conv=True)
    assert y1.shape == (2, 8, 8, 8), y1.shape
    # bf16 MXU operands with f32 accumulation: ~0.5% relative error budget.
    assert jnp.allclose(y1, ref1, atol=2e-2, rtol=2e-2), \
        float(jnp.max(jnp.abs(y1 - ref1)))

    # Case 2: identity-shortcut block (in=out=4, stride=1).
    params2 = _init_params(k_p2, 4, 4, use_1x1conv=False)
    fwd2 = jax.jit(functools.partial(residual_block_forward,
                                     stride=1, use_1x1conv=False))
    y2 = jax.block_until_ready(fwd2(x, params2))
    ref2 = _reference_forward(x, params2, stride=1, use_1x1conv=False)
    assert y2.shape == (2, 4, 16, 16), y2.shape
    assert jnp.allclose(y2, ref2, atol=2e-2, rtol=2e-2), \
        float(jnp.max(jnp.abs(y2 - ref2)))

    print("KERNEL_OK")
</pallas_src>

<mosaic_0001>
module attributes {stable_mosaic.version = 11 : i64} {
  func.func @kernel(%arg0: i32, %arg1: i32, %arg2: i32, %arg3: memref<64x128xbf16, #tpu.memory_space<vmem>>, %arg4: memref<128x128xbf16, #tpu.memory_space<vmem>>, %arg5: memref<1x128xf32, #tpu.memory_space<vmem>>, %arg6: memref<64x128xbf16, #tpu.memory_space<vmem>>, %arg7: memref<64x128xf32, #tpu.memory_space<vmem>>) attributes {dimension_semantics = [#tpu.dimension_semantics<parallel>, #tpu.dimension_semantics<parallel>, #tpu.dimension_semantics<arbitrary>], iteration_bounds = array<i64: 2, 1, 1>, scalar_prefetch = 0 : i64, scratch_operands = 1 : i64, tpu.core_type = #tpu.core_type<tc>, window_params = [{transform_indices = @transform_0, window_bounds = array<i64: 64, 128>}, {transform_indices = @transform_1, window_bounds = array<i64: 128, 128>}, {transform_indices = @transform_2, window_bounds = array<i64: 1, 128>}, {transform_indices = @transform_3, window_bounds = array<i64: 64, 128>}]} {
    %c0_i32 = arith.constant 0 : i32
    %0 = arith.cmpi eq, %arg2, %c0_i32 : i32
    %1 = arith.extui %0 : i1 to i32
    %c0_i32_0 = arith.constant 0 : i32
    %2 = arith.cmpi ne, %1, %c0_i32_0 : i32
    scf.if %2 {
      %cst_10 = arith.constant 0.000000e+00 : f32
      %12 = vector.broadcast %cst_10 : f32 to vector<64x128xf32>
      %c0_11 = arith.constant 0 : index
      %c0_12 = arith.constant 0 : index
      %13 = vector.load %arg7[%c0_11, %c0_12] : memref<64x128xf32, #tpu.memory_space<vmem>>, vector<64x128xf32>
      tpu.vector_store %arg7[%c0_11, %c0_12], %12 {strides = array<i32>} : memref<64x128xf32, #tpu.memory_space<vmem>>, vector<64x128xf32>,
    } else {
    }
    %c0 = arith.constant 0 : index
    %c0_1 = arith.constant 0 : index
    %3 = vector.load %arg7[%c0, %c0_1] : memref<64x128xf32, #tpu.memory_space<vmem>>, vector<64x128xf32>
    %c0_2 = arith.constant 0 : index
    %c0_3 = arith.constant 0 : index
    %4 = vector.load %arg3[%c0_2, %c0_3] : memref<64x128xbf16, #tpu.memory_space<vmem>>, vector<64x128xbf16>
    %c0_4 = arith.constant 0 : index
    %c0_5 = arith.constant 0 : index
    %5 = vector.load %arg4[%c0_4, %c0_5] : memref<128x128xbf16, #tpu.memory_space<vmem>>, vector<128x128xbf16>
    %cst = arith.constant dense<0.000000e+00> : vector<64x128xf32>
    %6 = tpu.matmul %4, %5, %cst {dimension_numbers = #tpu.dot_dimension_numbers<[1], [0], [0], [1], [0, 0, 1, 1], [], []>} : vector<64x128xbf16>, vector<128x128xbf16>, vector<64x128xf32> -> vector<64x128xf32>
    %7 = arith.addf %3, %6 : vector<64x128xf32>
    %c0_6 = arith.constant 0 : index
    %c0_7 = arith.constant 0 : index
    %8 = vector.load %arg7[%c0_6, %c0_7] : memref<64x128xf32, #tpu.memory_space<vmem>>, vector<64x128xf32>
    tpu.vector_store %arg7[%c0_6, %c0_7], %7 {strides = array<i32>} : memref<64x128xf32, #tpu.memory_space<vmem>>, vector<64x128xf32>,
    %c0_i32_8 = arith.constant 0 : i32
    %9 = arith.cmpi eq, %arg2, %c0_i32_8 : i32
    %10 = arith.extui %9 : i1 to i32
    %c0_i32_9 = arith.constant 0 : i32
    %11 = arith.cmpi ne, %10, %c0_i32_9 : i32
    scf.if %11 {
      %c0_10 = arith.constant 0 : index
      %c0_11 = arith.constant 0 : index
      %12 = vector.load %arg7[%c0_10, %c0_11] : memref<64x128xf32, #tpu.memory_space<vmem>>, vector<64x128xf32>
      %c0_12 = arith.constant 0 : index
      %c0_13 = arith.constant 0 : index
      %13 = vector.load %arg5[%c0_12, %c0_13] : memref<1x128xf32, #tpu.memory_space<vmem>>, vector<1x128xf32>
      %14 = vector.broadcast %13 : vector<1x128xf32> to vector<64x128xf32>
      %15 = arith.addf %12, %14 : vector<64x128xf32>
      %cst_14 = arith.constant 0.000000e+00 : f32
      %16 = vector.broadcast %cst_14 : f32 to vector<64x128xf32>
      %17 = arith.maximumf %15, %16 : vector<64x128xf32>
      %18 = arith.truncf %17 : vector<64x128xf32> to vector<64x128xbf16>
      %c0_15 = arith.constant 0 : index
      %c0_16 = arith.constant 0 : index
      %19 = vector.load %arg6[%c0_15, %c0_16] : memref<64x128xbf16, #tpu.memory_space<vmem>>, vector<64x128xbf16>
      tpu.vector_store %arg6[%c0_15, %c0_16], %18 {strides = array<i32>} : memref<64x128xbf16, #tpu.memory_space<vmem>>, vector<64x128xbf16>,
    } else {
    }
    return
  }
  func.func @transform_0(%arg0: i32, %arg1: i32, %arg2: i32) -> (i32, i32) {
    %c0_i32 = arith.constant 0 : i32
    return %arg0, %arg2 : i32, i32
  }
  func.func @transform_1(%arg0: i32, %arg1: i32, %arg2: i32) -> (i32, i32) {
    %c0_i32 = arith.constant 0 : i32
    return %arg2, %arg1 : i32, i32
  }
  func.func @transform_2(%arg0: i32, %arg1: i32, %arg2: i32) -> (i32, i32) {
    %c0_i32 = arith.constant 0 : i32
    %c0_i32_0 = arith.constant 0 : i32
    return %c0_i32, %arg1 : i32, i32
  }
  func.func @transform_3(%arg0: i32, %arg1: i32, %arg2: i32) -> (i32, i32) {
    %c0_i32 = arith.constant 0 : i32
    return %arg0, %arg1 : i32, i32
  }
}

module attributes {stable_mosaic.version = 11 : i64} {
  func.func @kernel(%arg0: i32, %arg1: i32, %arg2: i32, %arg3: memref<64x128xbf16, #tpu.memory_space<vmem>>, %arg4: memref<128x128xbf16, #tpu.memory_space<vmem>>, %arg5: memref<1x128xf32, #tpu.memory_space<vmem>>, %arg6: memref<64x128xbf16, #tpu.memory_space<vmem>>, %arg7: memref<64x128xf32, #tpu.memory_space<vmem>>) attributes {dimension_semantics = [#tpu.dimension_semantics<parallel>, #tpu.dimension_semantics<parallel>, #tpu.dimension_semantics<arbitrary>], iteration_bounds = array<i64: 2, 1, 1>, scalar_prefetch = 0 : i64, scratch_operands = 1 : i64, tpu.core_type = #tpu.core_type<tc>, window_params = [{transform_indices = @transform_0, window_bounds = array<i64: 64, 128>}, {transform_indices = @transform_1, window_bounds = array<i64: 128, 128>}, {transform_indices = @transform_2, window_bounds = array<i64: 1, 128>}, {transform_indices = @transform_3, window_bounds = array<i64: 64, 128>}]} {
    %c0_i32 = arith.constant 0 : i32
    %0 = arith.cmpi eq, %arg2, %c0_i32 : i32
    %1 = arith.extui %0 : i1 to i32
    %c0_i32_0 = arith.constant 0 : i32
    %2 = arith.cmpi ne, %1, %c0_i32_0 : i32
    scf.if %2 {
      %cst_10 = arith.constant 0.000000e+00 : f32
      %12 = vector.broadcast %cst_10 : f32 to vector<64x128xf32>
      %c0_11 = arith.constant 0 : index
      %c0_12 = arith.constant 0 : index
      %13 = vector.load %arg7[%c0_11, %c0_12] : memref<64x128xf32, #tpu.memory_space<vmem>>, vector<64x128xf32>
      tpu.vector_store %arg7[%c0_11, %c0_12], %12 {strides = array<i32>} : memref<64x128xf32, #tpu.memory_space<vmem>>, vector<64x128xf32>,
    } else {
    }
    %c0 = arith.constant 0 : index
    %c0_1 = arith.constant 0 : index
    %3 = vector.load %arg7[%c0, %c0_1] : memref<64x128xf32, #tpu.memory_space<vmem>>, vector<64x128xf32>
    %c0_2 = arith.constant 0 : index
    %c0_3 = arith.constant 0 : index
    %4 = vector.load %arg3[%c0_2, %c0_3] : memref<64x128xbf16, #tpu.memory_space<vmem>>, vector<64x128xbf16>
    %c0_4 = arith.constant 0 : index
    %c0_5 = arith.constant 0 : index
    %5 = vector.load %arg4[%c0_4, %c0_5] : memref<128x128xbf16, #tpu.memory_space<vmem>>, vector<128x128xbf16>
    %cst = arith.constant dense<0.000000e+00> : vector<64x128xf32>
    %6 = tpu.matmul %4, %5, %cst {dimension_numbers = #tpu.dot_dimension_numbers<[1], [0], [0], [1], [0, 0, 1, 1], [], []>} : vector<64x128xbf16>, vector<128x128xbf16>, vector<64x128xf32> -> vector<64x128xf32>
    %7 = arith.addf %3, %6 : vector<64x128xf32>
    %c0_6 = arith.constant 0 : index
    %c0_7 = arith.constant 0 : index
    %8 = vector.load %arg7[%c0_6, %c0_7] : memref<64x128xf32, #tpu.memory_space<vmem>>, vector<64x128xf32>
    tpu.vector_store %arg7[%c0_6, %c0_7], %7 {strides = array<i32>} : memref<64x128xf32, #tpu.memory_space<vmem>>, vector<64x128xf32>,
    %c0_i32_8 = arith.constant 0 : i32
    %9 = arith.cmpi eq, %arg2, %c0_i32_8 : i32
    %10 = arith.extui %9 : i1 to i32
    %c0_i32_9 = arith.constant 0 : i32
    %11 = arith.cmpi ne, %10, %c0_i32_9 : i32
    scf.if %11 {
      %c0_10 = arith.constant 0 : index
      %c0_11 = arith.constant 0 : index
      %12 = vector.load %arg7[%c0_10, %c0_11] : memref<64x128xf32, #tpu.memory_space<vmem>>, vector<64x128xf32>
      %c0_12 = arith.constant 0 : index
      %c0_13 = arith.constant 0 : index
      %13 = vector.load %arg5[%c0_12, %c0_13] : memref<1x128xf32, #tpu.memory_space<vmem>>, vector<1x128xf32>
      %14 = vector.broadcast %13 : vector<1x128xf32> to vector<64x128xf32>
      %15 = arith.addf %12, %14 : vector<64x128xf32>
      %16 = arith.truncf %15 : vector<64x128xf32> to vector<64x128xbf16>
      %c0_14 = arith.constant 0 : index
      %c0_15 = arith.constant 0 : index
      %17 = vector.load %arg6[%c0_14, %c0_15] : memref<64x128xbf16, #tpu.memory_space<vmem>>, vector<64x128xbf16>
      tpu.vector_store %arg6[%c0_14, %c0_15], %16 {strides = array<i32>} : memref<64x128xbf16, #tpu.memory_space<vmem>>, vector<64x128xbf16>,
    } else {
    }
    return
  }
  func.func @transform_0(%arg0: i32, %arg1: i32, %arg2: i32) -> (i32, i32) {
    %c0_i32 = arith.constant 0 : i32
    return %arg0, %arg2 : i32, i32
  }
  func.func @transform_1(%arg0: i32, %arg1: i32, %arg2: i32) -> (i32, i32) {
    %c0_i32 = arith.constant 0 : i32
    return %arg2, %arg1 : i32, i32
  }
  func.func @transform_2(%arg0: i32, %arg1: i32, %arg2: i32) -> (i32, i32) {
    %c0_i32 = arith.constant 0 : i32
    %c0_i32_0 = arith.constant 0 : i32
    return %c0_i32, %arg1 : i32, i32
  }
  func.func @transform_3(%arg0: i32, %arg1: i32, %arg2: i32) -> (i32, i32) {
    %c0_i32 = arith.constant 0 : i32
    return %arg0, %arg1 : i32, i32
  }
}

module attributes {stable_mosaic.version = 11 : i64} {
  func.func @kernel(%arg0: i32, %arg1: i32, %arg2: i32, %arg3: memref<64x128xbf16, #tpu.memory_space<vmem>>, %arg4: memref<128x128xbf16, #tpu.memory_space<vmem>>, %arg5: memref<1x128xf32, #tpu.memory_space<vmem>>, %arg6: memref<64x128xbf16, #tpu.memory_space<vmem>>, %arg7: memref<64x128xf32, #tpu.memory_space<vmem>>, %arg8: memref<64x128xf32, #tpu.memory_space<vmem>>) attributes {dimension_semantics = [#tpu.dimension_semantics<parallel>, #tpu.dimension_semantics<parallel>, #tpu.dimension_semantics<arbitrary>], iteration_bounds = array<i64: 2, 1, 1>, scalar_prefetch = 0 : i64, scratch_operands = 1 : i64, tpu.core_type = #tpu.core_type<tc>, window_params = [{transform_indices = @transform_0, window_bounds = array<i64: 64, 128>}, {transform_indices = @transform_1, window_bounds = array<i64: 128, 128>}, {transform_indices = @transform_2, window_bounds = array<i64: 1, 128>}, {transform_indices = @transform_3, window_bounds = array<i64: 64, 128>}, {transform_indices = @transform_4, window_bounds = array<i64: 64, 128>}]} {
    %c0_i32 = arith.constant 0 : i32
    %0 = arith.cmpi eq, %arg2, %c0_i32 : i32
    %1 = arith.extui %0 : i1 to i32
    %c0_i32_0 = arith.constant 0 : i32
    %2 = arith.cmpi ne, %1, %c0_i32_0 : i32
    scf.if %2 {
      %cst_10 = arith.constant 0.000000e+00 : f32
      %12 = vector.broadcast %cst_10 : f32 to vector<64x128xf32>
      %c0_11 = arith.constant 0 : index
      %c0_12 = arith.constant 0 : index
      %13 = vector.load %arg8[%c0_11, %c0_12] : memref<64x128xf32, #tpu.memory_space<vmem>>, vector<64x128xf32>
      tpu.vector_store %arg8[%c0_11, %c0_12], %12 {strides = array<i32>} : memref<64x128xf32, #tpu.memory_space<vmem>>, vector<64x128xf32>,
    } else {
    }
    %c0 = arith.constant 0 : index
    %c0_1 = arith.constant 0 : index
    %3 = vector.load %arg8[%c0, %c0_1] : memref<64x128xf32, #tpu.memory_space<vmem>>, vector<64x128xf32>
    %c0_2 = arith.constant 0 : index
    %c0_3 = arith.constant 0 : index
    %4 = vector.load %arg3[%c0_2, %c0_3] : memref<64x128xbf16, #tpu.memory_space<vmem>>, vector<64x128xbf16>
    %c0_4 = arith.constant 0 : index
    %c0_5 = arith.constant 0 : index
    %5 = vector.load %arg4[%c0_4, %c0_5] : memref<128x128xbf16, #tpu.memory_space<vmem>>, vector<128x128xbf16>
    %cst = arith.constant dense<0.000000e+00> : vector<64x128xf32>
    %6 = tpu.matmul %4, %5, %cst {dimension_numbers = #tpu.dot_dimension_numbers<[1], [0], [0], [1], [0, 0, 1, 1], [], []>} : vector<64x128xbf16>, vector<128x128xbf16>, vector<64x128xf32> -> vector<64x128xf32>
    %7 = arith.addf %3, %6 : vector<64x128xf32>
    %c0_6 = arith.constant 0 : index
    %c0_7 = arith.constant 0 : index
    %8 = vector.load %arg8[%c0_6, %c0_7] : memref<64x128xf32, #tpu.memory_space<vmem>>, vector<64x128xf32>
    tpu.vector_store %arg8[%c0_6, %c0_7], %7 {strides = array<i32>} : memref<64x128xf32, #tpu.memory_space<vmem>>, vector<64x128xf32>,
    %c0_i32_8 = arith.constant 0 : i32
    %9 = arith.cmpi eq, %arg2, %c0_i32_8 : i32
    %10 = arith.extui %9 : i1 to i32
    %c0_i32_9 = arith.constant 0 : i32
    %11 = arith.cmpi ne, %10, %c0_i32_9 : i32
    scf.if %11 {
      %c0_10 = arith.constant 0 : index
      %c0_11 = arith.constant 0 : index
      %12 = vector.load %arg8[%c0_10, %c0_11] : memref<64x128xf32, #tpu.memory_space<vmem>>, vector<64x128xf32>
      %c0_12 = arith.constant 0 : index
      %c0_13 = arith.constant 0 : index
      %13 = vector.load %arg5[%c0_12, %c0_13] : memref<1x128xf32, #tpu.memory_space<vmem>>, vector<1x128xf32>
      %14 = vector.broadcast %13 : vector<1x128xf32> to vector<64x128xf32>
      %15 = arith.addf %12, %14 : vector<64x128xf32>
      %c0_14 = arith.constant 0 : index
      %c0_15 = arith.constant 0 : index
      %16 = vector.load %arg6[%c0_14, %c0_15] : memref<64x128xbf16, #tpu.memory_space<vmem>>, vector<64x128xbf16>
      %17 = arith.extf %16 : vector<64x128xbf16> to vector<64x128xf32>
      %18 = arith.addf %15, %17 : vector<64x128xf32>
      %cst_16 = arith.constant 0.000000e+00 : f32
      %19 = vector.broadcast %cst_16 : f32 to vector<64x128xf32>
      %20 = arith.maximumf %18, %19 : vector<64x128xf32>
      %c0_17 = arith.constant 0 : index
      %c0_18 = arith.constant 0 : index
      %21 = vector.load %arg7[%c0_17, %c0_18] : memref<64x128xf32, #tpu.memory_space<vmem>>, vector<64x128xf32>
      tpu.vector_store %arg7[%c0_17, %c0_18], %20 {strides = array<i32>} : memref<64x128xf32, #tpu.memory_space<vmem>>, vector<64x128xf32>,
    } else {
    }
    return
  }
  func.func @transform_0(%arg0: i32, %arg1: i32, %arg2: i32) -> (i32, i32) {
    %c0_i32 = arith.constant 0 : i32
    return %arg0, %arg2 : i32, i32
  }
  func.func @transform_1(%arg0: i32, %arg1: i32, %arg2: i32) -> (i32, i32) {
    %c0_i32 = arith.constant 0 : i32
    return %arg2, %arg1 : i32, i32
  }
  func.func @transform_2(%arg0: i32, %arg1: i32, %arg2: i32) -> (i32, i32) {
    %c0_i32 = arith.constant 0 : i32
    %c0_i32_0 = arith.constant 0 : i32
    return %c0_i32, %arg1 : i32, i32
  }
  func.func @transform_3(%arg0: i32, %arg1: i32, %arg2: i32) -> (i32, i32) {
    %c0_i32 = arith.constant 0 : i32
    return %arg0, %arg1 : i32, i32
  }
  func.func @transform_4(%arg0: i32, %arg1: i32, %arg2: i32) -> (i32, i32) {
    %c0_i32 = arith.constant 0 : i32
    return %arg0, %arg1 : i32, i32
  }
}

</mosaic_0001>

<llo_original>
// kernel: residual_block_forward.3
$region0: #{residual_block_forward.3}
  #allocation0 [shape = 'u32[]', space=smem, size = 0x4, offset = 0x4, fixed_abs, tag = 'smem constant byte address 0x4 - core index']
  #allocation1 [shape = 'u32[144,128]{1,0:T(1,128)}', space=vmem, size = 0x12000, scoped, tag = 'internal scratch']
  #allocation2 [shape = 'f32[64,128]{1,0:T(8,128)}', space=vmem, size = 0x8000, scoped, tag = 'scratch operand']
  %s0 = inlined_call_operand.vmem [shape: bf16[128,128], index: 0, kind: input, shape index: {}]
  %s1 = inlined_call_operand.vmem [shape: bf16[128,128], index: 1, kind: input, shape index: {}]
  %s2 = inlined_call_operand.vmem [shape: f32[1,128], index: 2, kind: input, shape index: {}]
  %s3 = inlined_call_operand.vmem [shape: bf16[128,128], index: 3, kind: output, shape index: {}]
  %s4 = sld [smem:[#allocation0]]
  $region53: #{residual_block_forward.3} parent=0
    _
  %s6 = ssub.s32 1, %s4
  %s7 = scalar_select 0, %s6, %s4
  loop: start=0, step=1, limit=4
  $region2: #{residual_block_forward.3} parent=0 // loop_pre_header
    _
  $region3: #{residual_block_forward.3} parent=0 // loop_header
    %s9 = sphi 0, %s13
    %p10 = scmp.ge.s32.totalorder %s9, 4
    %s16 = sphi 0, %s35
    %s17 = sphi 0, %s31
    %s18 = sphi 0, %s27
    %s19 = sphi 0, %s16
    %s20 = sphi 0, %s17
    %s21 = sphi 0, %s18
    %s22 = sphi 0, %s19
    %s23 = sphi 0, %s20
    %s24 = sphi 0, %s21
    %s40 = sphi 0, %s42
    %s43 = sphi 0, %s40
    %s44 = sphi 0, %s43
    %s60 = sphi 0, %s44
    %s68 = sphi 0, %s70
    %s71 = sphi 0, %s68
    %s72 = sphi 0, %s71
    %s88 = sphi 0, %s72
    %s94 = sphi 0, %s96
    %s97 = sphi 0, %s94
    %s98 = sphi 0, %s97
    %s114 = sphi 0, %s98
    %s122 = sphi 0, %s124
    %s125 = sphi 0, %s122
    %s126 = sphi 0, %s125
    %s142 = sphi 0, %s126
  $region4: #{residual_block_forward.3} parent=0 // loop_header_branch
    %12 = sbr.rel (%p10) target = $region8
  $region5: #{residual_block_forward.3} parent=0 // loop_body
    %s14 = ssub.s32 %s9, 1
    %s15 = ssub.s32 %s9, 2
    %s25 = sadd.s32 1, %s18
    %p26 = scmp.ge.s32.totalorder %s25, 1
    %s27 = scalar_select %p26, 0, %s25
    %s28 = sadd.s32 1, %s17
    %s29 = scalar_select %p26, %s28, %s17
    %p30 = scmp.ge.s32.totalorder %s29, 1
    %s31 = scalar_select %p30, 0, %s29
    %s32 = sadd.s32 1, %s16
    %s33 = scalar_select %p30, %s32, %s16
    %p34 = scmp.ge.s32.totalorder %s33, 2
    %s35 = scalar_select %p34, 0, %s33
    %s36 = ssub.s32 %s16, %s35
    %s37 = ssub.s32 %s18, %s27
    %s38 = sor.u32 %s36, %s37
    %p39 = scmp.eq.s32.totalorder %s38, 0
    %s41 = sadd.s32 %s40, 1
    %s42 = scalar_select %p39, %s40, %s41
    %p45 = pneg %p39
    %p46 = scmp.eq.s32.totalorder %s9, 1
    %p47 = por %p45, %p46
    %p48 = scmp.ne.s32.totalorder %s40, %s43
    %p49 = scmp.eq.s32.totalorder %s9, 0
    %p50 = por %p48, %p49
    %p51 = scmp.ne.s32.totalorder %s40, %s43
    %p52 = scmp.eq.s32.totalorder %s14, 1
    %p53 = por %p51, %p52
    %p54 = scmp.ne.s32.totalorder %s43, %s44
    %p55 = scmp.eq.s32.totalorder %s14, 0
    %p56 = por %p54, %p55
    %p57 = scmp.ne.s32.totalorder %s43, %s44
    %p58 = scmp.eq.s32.totalorder %s15, 1
    %p59 = por %p57, %p58
    %p61 = scmp.ne.s32.totalorder %s44, %s60
    %p62 = scmp.eq.s32.totalorder %s15, 0
    %p63 = por %p61, %p62
    %s64 = ssub.s32 %s18, %s27
    %s65 = ssub.s32 %s17, %s31
    %s66 = sor.u32 %s64, %s65
    %p67 = scmp.eq.s32.totalorder %s66, 0
    %s69 = sadd.s32 %s68, 1
    %s70 = scalar_select %p67, %s68, %s69
    %p73 = pneg %p67
    %p74 = scmp.eq.s32.totalorder %s9, 1
    %p75 = por %p73, %p74
    %p76 = scmp.ne.s32.totalorder %s68, %s71
    %p77 = scmp.eq.s32.totalorder %s9, 0
    %p78 = por %p76, %p77
    %p79 = scmp.ne.s32.totalorder %s68, %s71
    %p80 = scmp.eq.s32.totalorder %s14, 1
    %p81 = por %p79, %p80
    %p82 = scmp.ne.s32.totalorder %s71, %s72
    %p83 = scmp.eq.s32.totalorder %s14, 0
    %p84 = por %p82, %p83
    %p85 = scmp.ne.s32.totalorder %s71, %s72
    %p86 = scmp.eq.s32.totalorder %s15, 1
    %p87 = por %p85, %p86
    %p89 = scmp.ne.s32.totalorder %s72, %s88
    %p90 = scmp.eq.s32.totalorder %s15, 0
    %p91 = por %p89, %p90
    %s92 = ssub.s32 %s17, %s31
    %p93 = scmp.eq.s32.totalorder %s92, 0
    %s95 = sadd.s32 %s94, 1
    %s96 = scalar_select %p93, %s94, %s95
    %p99 = pneg %p93
    %p100 = scmp.eq.s32.totalorder %s9, 1
    %p101 = por %p99, %p100
    %p102 = scmp.ne.s32.totalorder %s94, %s97
    %p103 = scmp.eq.s32.totalorder %s9, 0
    %p104 = por %p102, %p103
    %p105 = scmp.ne.s32.totalorder %s94, %s97
    %p106 = scmp.eq.s32.totalorder %s14, 1
    %p107 = por %p105, %p106
    %p108 = scmp.ne.s32.totalorder %s97, %s98
    %p109 = scmp.eq.s32.totalorder %s14, 0
    %p110 = por %p108, %p109
    %p111 = scmp.ne.s32.totalorder %s97, %s98
    %p112 = scmp.eq.s32.totalorder %s15, 1
    %p113 = por %p111, %p112
    %p115 = scmp.ne.s32.totalorder %s98, %s114
    %p116 = scmp.eq.s32.totalorder %s15, 0
    %p117 = por %p115, %p116
    %s118 = ssub.s32 %s16, %s35
    %s119 = ssub.s32 %s17, %s31
    %s120 = sor.u32 %s118, %s119
    %p121 = scmp.eq.s32.totalorder %s120, 0
    %s123 = sadd.s32 %s122, 1
    %s124 = scalar_select %p121, %s122, %s123
    %p127 = pneg %p121
    %p128 = scmp.eq.s32.totalorder %s9, 1
    %p129 = por %p127, %p128
    %p130 = scmp.ne.s32.totalorder %s122, %s125
    %p131 = scmp.eq.s32.totalorder %s9, 0
    %p132 = por %p130, %p131
    %p133 = scmp.ne.s32.totalorder %s122, %s125
    %p134 = scmp.eq.s32.totalorder %s14, 1
    %p135 = por %p133, %p134
    %p136 = scmp.ne.s32.totalorder %s125, %s126
    %p137 = scmp.eq.s32.totalorder %s14, 0
    %p138 = por %p136, %p137
    %p139 = scmp.ne.s32.totalorder %s125, %s126
    %p140 = scmp.eq.s32.totalorder %s15, 1
    %p141 = por %p139, %p140
    %p143 = scmp.ne.s32.totalorder %s126, %s142
    %p144 = scmp.eq.s32.totalorder %s15, 0
    %p145 = por %p143, %p144
    %p146 = scmp.le.s32.totalorder 1, %s9
    %p147 = scmp.lt.s32.totalorder %s9, 3
    %p148 = pnand %p146, %p147
    %p149 = pneg %p148
    // Predicated region
    $region9: #{residual_block_forward.3} parent=5 // pred_check
      _
    $region10: #{residual_block_forward.3} parent=5 // pred_check_branch
      %151 = sbr.rel (%p148) target = $region12
    $region11: #{residual_block_forward.3} parent=5 // pred_region
      %s152 = ssub.s32 %s9, 1
      // Predicated region
      $region13: #{residual_block_forward.3} parent=11 // pred_check
        %p153 = pneg %p84
      $region14: #{residual_block_forward.3} parent=11 // pred_check_branch
        %155 = sbr.rel (%p153) target = $region16
      $region15: #{residual_block_forward.3} parent=11 // pred_region
        %s156 = smul.u32 16, %s21
        %p157 = scmp.lt.s32.totalorder %s156, 15
        %s158 = scalar_select %p157, %s156, 15
        %p159 = scmp.lt.s32.totalorder %s20, 0
        %s160 = scalar_select %p159, %s20, 0
        %s161 = sadd.s32 %s160, %s158
        %s162 = smul.addr %s161, 4
        %s163 = scalar_lea.vmem %s1, %s162
        %s164 = smul.u32 16, %s21
      $region16: #{residual_block_forward.3} parent=11 // pred_fallthru
        _
      // Predicated region
      $region17: #{residual_block_forward.3} parent=11 // pred_check
        %p165 = pneg %p110
      $region18: #{residual_block_forward.3} parent=11 // pred_check_branch
        %167 = sbr.rel (%p165) target = $region20
      $region19: #{residual_block_forward.3} parent=11 // pred_region
        %p168 = scmp.lt.s32.totalorder %s20, 0
        %s169 = scalar_select %p168, %s20, 0
        %s170 = scalar_lea.vmem %s2, %s169
      $region20: #{residual_block_forward.3} parent=11 // pred_fallthru
        _
    $region12: #{residual_block_forward.3} parent=5 // pred_fallthru
      _
    %p171 = scmp.lt.s32.totalorder %s9, 2
    // Predicated region
    $region21: #{residual_block_forward.3} parent=5 // pred_check
      %p172 = pneg %p171
    $region22: #{residual_block_forward.3} parent=5 // pred_check_branch
      %174 = sbr.rel (%p172) target = $region24
    $region23: #{residual_block_forward.3} parent=5 // pred_region
      // Predicated region
      $region25: #{residual_block_forward.3} parent=23 // pred_check
        %p175 = pneg %p50
      $region26: #{residual_block_forward.3} parent=23 // pred_check_branch
        %177 = sbr.rel (%p175) target = $region28
      $region27: #{residual_block_forward.3} parent=23 // pred_region
        %s178 = smul.u32 8, %s16
        %p179 = scmp.lt.s32.totalorder %s178, 15
        %s180 = scalar_select %p179, %s178, 15
        %p181 = scmp.lt.s32.totalorder %s18, 0
        %s182 = scalar_select %p181, %s18, 0
        %s183 = sadd.s32 %s182, %s180
        %s184 = smul.addr %s183, 4
        %s185 = scalar_lea.vmem %s0, %s184
        %s186 = smul.u32 8, %s16
      $region28: #{residual_block_forward.3} parent=23 // pred_fallthru
        _
    $region24: #{residual_block_forward.3} parent=5 // pred_fallthru
      _
    %p187 = scmp.le.s32.totalorder 1, %s9
    %p188 = scmp.lt.s32.totalorder %s9, 3
    %p189 = pnand %p187, %p188
    %p190 = pneg %p189
    // Predicated region
    $region29: #{residual_block_forward.3} parent=5 // pred_check
      _
    $region30: #{residual_block_forward.3} parent=5 // pred_check_branch
      %192 = sbr.rel (%p189) target = $region32
    $region31: #{residual_block_forward.3} parent=5 // pred_region
      %s193 = ssub.s32 %s9, 1
      %s194 = smul.u32 8, %s19
      %p195 = scmp.lt.s32.totalorder %s194, 15
      %s196 = scalar_select %p195, %s194, 15
      %p197 = scmp.lt.s32.totalorder %s21, 0
      %s198 = scalar_select %p197, %s21, 0
      %s199 = sadd.s32 %s198, %s196
      %s200 = smul.addr %s199, 4
      %s201 = scalar_lea.vmem %s0, %s200
      %p202 = pneg %p56
      %p203 = pneg %p53
      %s204 = smul.u32 16, %s21
      %p205 = scmp.lt.s32.totalorder %s204, 15
      %s206 = scalar_select %p205, %s204, 15
      %p207 = scmp.lt.s32.totalorder %s20, 0
      %s208 = scalar_select %p207, %s20, 0
      %s209 = sadd.s32 %s208, %s206
      %s210 = smul.addr %s209, 4
      %s211 = scalar_lea.vmem %s1, %s210
      %p212 = pneg %p84
      %p213 = pneg %p81
      %p214 = scmp.lt.s32.totalorder %s20, 0
      %s215 = scalar_select %p214, %s20, 0
      %s216 = scalar_lea.vmem %s2, %s215
      %p217 = pneg %p110
      %p218 = pneg %p107
      %p219 = pneg %p138
      %p220 = pneg %p135
      %s221 = smul.u32 8, %s19
      %p222 = scmp.lt.s32.totalorder %s221, 15
      %s223 = scalar_select %p222, %s221, 15
      %p224 = scmp.lt.s32.totalorder %s20, 0
      %s225 = scalar_select %p224, %s20, 0
      %s226 = sadd.s32 %s225, %s223
      %s227 = smul.addr %s226, 4
      %s228 = scalar_lea.vmem %s3, %s227
      %s229 = smul.u32 8, %s19
      %p230 = scmp.lt.s32.totalorder %s229, 15
      %s231 = scalar_select %p230, %s229, 15
      %p232 = scmp.lt.s32.totalorder %s21, 0
      %s233 = scalar_select %p232, %s21, 0
      %s234 = sadd.s32 %s233, %s231
      %s235 = smul.addr %s234, 4
      %s236 = scalar_lea.vmem %s0, %s235
      %s237 = smul.u32 8, %s19
      %s238 = smul.u32 16, %s21
      %p239 = scmp.lt.s32.totalorder %s238, 15
      %s240 = scalar_select %p239, %s238, 15
      %p241 = scmp.lt.s32.totalorder %s20, 0
      %s242 = scalar_select %p241, %s20, 0
      %s243 = sadd.s32 %s242, %s240
      %s244 = smul.addr %s243, 4
      %s245 = scalar_lea.vmem %s1, %s244
      %s246 = smul.u32 16, %s21
      %p247 = scmp.lt.s32.totalorder %s20, 0
      %s248 = scalar_select %p247, %s20, 0
      %s249 = scalar_lea.vmem %s2, %s248
      %s250 = smul.u32 8, %s19
      %p251 = scmp.lt.s32.totalorder %s250, 15
      %s252 = scalar_select %p251, %s250, 15
      %p253 = scmp.lt.s32.totalorder %s20, 0
      %s254 = scalar_select %p253, %s20, 0
      %s255 = sadd.s32 %s254, %s252
      %s256 = smul.addr %s255, 4
      %s257 = scalar_lea.vmem %s3, %s256
      %s258 = smul.u32 8, %s19
      %p260 = scmp.eq.s32.totalorder %s21, 0
      // Predicated region
      $region33: #{residual_block_forward.3} parent=31 // pred_check
        %p261 = pneg %p260
      $region34: #{residual_block_forward.3} parent=31 // pred_check_branch
        %263 = sbr.rel (%p261) target = $region36
      $region35: #{residual_block_forward.3} parent=31 // pred_region
        %264 = vst [vmem:[#allocation2] sm:$0xff] 0.0
        %265 = vst [vmem:[#allocation2 + $0x8] sm:$0xff] 0.0
        %266 = vst [vmem:[#allocation2 + $0x10] sm:$0xff] 0.0
        %267 = vst [vmem:[#allocation2 + $0x18] sm:$0xff] 0.0
        %268 = vst [vmem:[#allocation2 + $0x20] sm:$0xff] 0.0
        %269 = vst [vmem:[#allocation2 + $0x28] sm:$0xff] 0.0
        %270 = vst [vmem:[#allocation2 + $0x30] sm:$0xff] 0.0
        %271 = vst [vmem:[#allocation2 + $0x38] sm:$0xff] 0.0
      $region36: #{residual_block_forward.3} parent=31 // pred_fallthru
        _
      %v272 = vld [vmem:[#allocation2] sm:$0xff]
      %v273 = vld [vmem:[#allocation2 + $0x8] sm:$0xff]
      %v274 = vld [vmem:[#allocation2 + $0x10] sm:$0xff]
      %v275 = vld [vmem:[#allocation2 + $0x18] sm:$0xff]
      %v276 = vld [vmem:[#allocation2 + $0x20] sm:$0xff]
      %v277 = vld [vmem:[#allocation2 + $0x28] sm:$0xff]
      %v278 = vld [vmem:[#allocation2 + $0x30] sm:$0xff]
      %v279 = vld [vmem:[#allocation2 + $0x38] sm:$0xff]
      %v280 = vld [vmem:[%s236] sm:$0xf]
      %v281 = vld [vmem:[%s236 + $0x4] sm:$0xf]
      %v282 = vld [vmem:[%s236 + $0x8] sm:$0xf]
      %v283 = vld [vmem:[%s236 + $0xc] sm:$0xf]
      %v284 = vld [vmem:[%s236 + $0x10] sm:$0xf]
      %v285 = vld [vmem:[%s236 + $0x14] sm:$0xf]
      %v286 = vld [vmem:[%s236 + $0x18] sm:$0xf]
      %v287 = vld [vmem:[%s236 + $0x1c] sm:$0xf]
      %v288 = vld [vmem:[%s245] sm:$0xf]
      %v289 = vld [vmem:[%s245 + $0x4] sm:$0xf]
      %v290 = vld [vmem:[%s245 + $0x8] sm:$0xf]
      %v291 = vld [vmem:[%s245 + $0xc] sm:$0xf]
      %v292 = vld [vmem:[%s245 + $0x10] sm:$0xf]
      %v293 = vld [vmem:[%s245 + $0x14] sm:$0xf]
      %v294 = vld [vmem:[%s245 + $0x18] sm:$0xf]
      %v295 = vld [vmem:[%s245 + $0x1c] sm:$0xf]
      %v296 = vld [vmem:[%s245 + $0x20] sm:$0xf]
      %v297 = vld [vmem:[%s245 + $0x24] sm:$0xf]
      %v298 = vld [vmem:[%s245 + $0x28] sm:$0xf]
      %v299 = vld [vmem:[%s245 + $0x2c] sm:$0xf]
      %v300 = vld [vmem:[%s245 + $0x30] sm:$0xf]
      %v301 = vld [vmem:[%s245 + $0x34] sm:$0xf]
      %v302 = vld [vmem:[%s245 + $0x38] sm:$0xf]
      %v303 = vld [vmem:[%s245 + $0x3c] sm:$0xf]
      %v312 = vunpack.c.l.b16 %v280
      %v313 = vunpack.c.l.b16 %v281
      %v314 = vunpack.c.l.b16 %v282
      %v315 = vunpack.c.l.b16 %v283
      %v316 = vunpack.c.l.b16 %v284
      %v317 = vunpack.c.l.b16 %v285
      %v318 = vunpack.c.l.b16 %v286
      %v319 = vunpack.c.l.b16 %v287
      %v320 = vpack.c.b16 %v313, %v312
      %v321 = vpack.c.b16 %v315, %v314
      %v322 = vpack.c.b16 %v317, %v316
      %v323 = vpack.c.b16 %v319, %v318
      %v344 = vunpack.c.l.b16 %v288
      %v345 = vunpack.c.l.b16 %v289
      %v346 = vunpack.c.l.b16 %v290
      %v347 = vunpack.c.l.b16 %v291
      %v348 = vunpack.c.l.b16 %v292
      %v349 = vunpack.c.l.b16 %v293
      %v350 = vunpack.c.l.b16 %v294
      %v351 = vunpack.c.l.b16 %v295
      %v352 = vunpack.c.l.b16 %v296
      %v353 = vunpack.c.l.b16 %v297
      %v354 = vunpack.c.l.b16 %v298
      %v355 = vunpack.c.l.b16 %v299
      %v356 = vunpack.c.l.b16 %v300
      %v357 = vunpack.c.l.b16 %v301
      %v358 = vunpack.c.l.b16 %v302
      %v359 = vunpack.c.l.b16 %v303
      %v360 = vpack.c.b16 %v345, %v344
      %v361 = vpack.c.b16 %v347, %v346
      %v362 = vpack.c.b16 %v349, %v348
      %v363 = vpack.c.b16 %v351, %v350
      %v364 = vpack.c.b16 %v353, %v352
      %v365 = vpack.c.b16 %v355, %v354
      %v366 = vpack.c.b16 %v357, %v356
      %v367 = vpack.c.b16 %v359, %v358
      %376 = vmatprep.subr.bf16.mxu0 0
      %377 = vmatpush1.bf16.msra.mxu0 %v367
      %378 = vmatprep.subr.bf16.mxu0 0
      %379 = vmatpush1.bf16.msra.mxu0 %v366
      %380 = vmatprep.subr.bf16.mxu0 0
      %381 = vmatpush1.bf16.msra.mxu0 %v365
      %382 = vmatprep.subr.bf16.mxu0 0
      %383 = vmatpush1.bf16.msra.mxu0 %v364
      %384 = vmatprep.subr.bf16.mxu0 0
      %385 = vmatpush1.bf16.msra.mxu0 %v363
      %386 = vmatprep.subr.bf16.mxu0 0
      %387 = vmatpush1.bf16.msra.mxu0 %v362
      %388 = vmatprep.subr.bf16.mxu0 0
      %389 = vmatpush1.bf16.msra.mxu0 %v361
      %390 = vmatprep.subr.bf16.mxu0 0
      %391 = vmatpush1.bf16.msra.mxu0 %v360
      %392 = vmatprep.subr.bf16.mxu0 0
      %393 = vmatpush2.bf16.msra.mxu0 0
      %394 = vmatprep.subr.bf16.mxu0 0
      %395 = vmatpush2.bf16.msra.mxu0 0
      %396 = vmatprep.subr.bf16.mxu0 0
      %397 = vmatpush2.bf16.msra.mxu0 0
      %398 = vmatprep.subr.bf16.mxu0 0
      %399 = vmatpush2.bf16.msra.mxu0 0
      %400 = vmatprep.subr.bf16.mxu0 0
      %401 = vmatpush2.bf16.msra.mxu0 0
      %402 = vmatprep.subr.bf16.mxu0 0
      %403 = vmatpush2.bf16.msra.mxu0 0
      %404 = vmatprep.subr.bf16.mxu0 0
      %405 = vmatpush2.bf16.msra.mxu0 0
      %406 = vmatprep.subr.bf16.mxu0 0
      %407 = vmatpush2.bf16.msra.mxu0 0
      %408 = vmatprep.mubr.bf16.mxu0 0
      %409 = vmatmul.mubr.bf16.gmra.mxu0 %v320
      %v410 = vpop.f32.mrf.mxu0
      %v411 = vadd.f32 0.0, %v410
      %v412 = vpop.f32.mrf.mxu0
      %v413 = vpop.f32.mrf.mxu0
      %v414 = vadd.f32 0.0, %v413
      %v415 = vpop.f32.mrf.mxu0
      %416 = vmatprep.mubr.bf16.mxu0 0
      %417 = vmatmul.mubr.bf16.gmra.mxu0 %v321
      %v418 = vpop.f32.mrf.mxu0
      %v419 = vadd.f32 0.0, %v418
      %v420 = vpop.f32.mrf.mxu0
      %v421 = vpop.f32.mrf.mxu0
      %v422 = vadd.f32 0.0, %v421
      %v423 = vpop.f32.mrf.mxu0
      %424 = vmatprep.mubr.bf16.mxu0 0
      %425 = vmatmul.mubr.bf16.gmra.mxu0 %v322
      %v426 = vpop.f32.mrf.mxu0
      %v427 = vadd.f32 0.0, %v426
      %v428 = vpop.f32.mrf.mxu0
      %v429 = vpop.f32.mrf.mxu0
      %v430 = vadd.f32 0.0, %v429
      %v431 = vpop.f32.mrf.mxu0
      %432 = vmatprep.mubr.bf16.mxu0 0
      %433 = vmatmul.mubr.bf16.gmra.mxu0 %v323
      %v434 = vpop.f32.mrf.mxu0
      %v435 = vadd.f32 0.0, %v434
      %v436 = vpop.f32.mrf.mxu0
      %v437 = vpop.f32.mrf.mxu0
      %v438 = vadd.f32 0.0, %v437
      %v439 = vpop.f32.mrf.mxu0
      %440 = vdwg.mxu0
      %v441 = vadd.f32 %v272, %v411
      %v442 = vadd.f32 %v273, %v414
      %v443 = vadd.f32 %v274, %v419
      %v444 = vadd.f32 %v275, %v422
      %v445 = vadd.f32 %v276, %v427
      %v446 = vadd.f32 %v277, %v430
      %v447 = vadd.f32 %v278, %v435
      %v448 = vadd.f32 %v279, %v438
      %449 = vst [vmem:[#allocation2] sm:$0xff] %v441
      %450 = vst [vmem:[#allocation2 + $0x8] sm:$0xff] %v442
      %451 = vst [vmem:[#allocation2 + $0x10] sm:$0xff] %v443
      %452 = vst [vmem:[#allocation2 + $0x18] sm:$0xff] %v444
      %453 = vst [vmem:[#allocation2 + $0x20] sm:$0xff] %v445
      %454 = vst [vmem:[#allocation2 + $0x28] sm:$0xff] %v446
      %455 = vst [vmem:[#allocation2 + $0x30] sm:$0xff] %v447
      %456 = vst [vmem:[#allocation2 + $0x38] sm:$0xff] %v448
      // Predicated region
      $region37: #{residual_block_forward.3} parent=31 // pred_check
        %p457 = pneg %p260
      $region38: #{residual_block_forward.3} parent=31 // pred_check_branch
        %459 = sbr.rel (%p457) target = $region40
      $region39: #{residual_block_forward.3} parent=31 // pred_region
        %v460 = vld [vmem:[#allocation2] sm:$0xff]
        %v461 = vld [vmem:[#allocation2 + $0x8] sm:$0xff]
        %v462 = vld [vmem:[#allocation2 + $0x10] sm:$0xff]
        %v463 = vld [vmem:[#allocation2 + $0x18] sm:$0xff]
        %v464 = vld [vmem:[#allocation2 + $0x20] sm:$0xff]
        %v465 = vld [vmem:[#allocation2 + $0x28] sm:$0xff]
        %v466 = vld [vmem:[#allocation2 + $0x30] sm:$0xff]
        %v467 = vld [vmem:[#allocation2 + $0x38] sm:$0xff]
        %v468 = vld [vmem:[%s249] sm:$0x1]
        %v470 = vlaneseq
        %v471 = vshrl.u32 %v470, 7
        %v472 = vsub.s32 0, %v471
        %v473 = vrot.slane %v468, %v472
        %v475 = vadd.f32 %v460, %v473
        %v476 = vadd.f32 %v461, %v473
        %v477 = vadd.f32 %v462, %v473
        %v478 = vadd.f32 %v463, %v473
        %v479 = vadd.f32 %v464, %v473
        %v480 = vadd.f32 %v465, %v473
        %v481 = vadd.f32 %v466, %v473
        %v482 = vadd.f32 %v467, %v473
        %v483 = vmax.f32 %v475, 0.0
        %v484 = vmax.f32 %v476, 0.0
        %v485 = vmax.f32 %v477, 0.0
        %v486 = vmax.f32 %v478, 0.0
        %v487 = vmax.f32 %v479, 0.0
        %v488 = vmax.f32 %v480, 0.0
        %v489 = vmax.f32 %v481, 0.0
        %v490 = vmax.f32 %v482, 0.0
        %v491 = vpack.c.bf16 %v484, %v483
        %v492 = vpack.c.bf16 %v486, %v485
        %v493 = vpack.c.bf16 %v488, %v487
        %v494 = vpack.c.bf16 %v490, %v489
        %v499 = vunpack.c.l.b16 %v491
        %v500 = vunpack.c.h.b16 %v491
        %v501 = vunpack.c.l.b16 %v492
        %v502 = vunpack.c.h.b16 %v492
        %v503 = vunpack.c.l.b16 %v493
        %v504 = vunpack.c.h.b16 %v493
        %v505 = vunpack.c.l.b16 %v494
        %v506 = vunpack.c.h.b16 %v494
        %v507 = vpack.c.b16 %v499, %v499
        %v508 = vpack.c.b16 %v500, %v500
        %v509 = vpack.c.b16 %v501, %v501
        %v510 = vpack.c.b16 %v502, %v502
        %v511 = vpack.c.b16 %v503, %v503
        %v512 = vpack.c.b16 %v504, %v504
        %v513 = vpack.c.b16 %v505, %v505
        %v514 = vpack.c.b16 %v506, %v506
        %523 = vst [vmem:[%s257] sm:$0xf] %v507
        %524 = vst [vmem:[%s257 + $0x4] sm:$0xf] %v508
        %525 = vst [vmem:[%s257 + $0x8] sm:$0xf] %v509
        %526 = vst [vmem:[%s257 + $0xc] sm:$0xf] %v510
        %527 = vst [vmem:[%s257 + $0x10] sm:$0xf] %v511
        %528 = vst [vmem:[%s257 + $0x14] sm:$0xf] %v512
        %529 = vst [vmem:[%s257 + $0x18] sm:$0xf] %v513
        %530 = vst [vmem:[%s257 + $0x1c] sm:$0xf] %v514
      $region40: #{residual_block_forward.3} parent=31 // pred_fallthru
        _
      %s531 = smul.u32 8, %s19
      %p532 = scmp.lt.s32.totalorder %s531, 15
      %s533 = scalar_select %p532, %s531, 15
      %p534 = scmp.lt.s32.totalorder %s20, 0
      %s535 = scalar_select %p534, %s20, 0
      %s536 = sadd.s32 %s535, %s533
      %s537 = smul.addr %s536, 4
      %s538 = scalar_lea.vmem %s3, %s537
      // Predicated region
      $region41: #{residual_block_forward.3} parent=31 // pred_check
        %p539 = pneg %p135
      $region42: #{residual_block_forward.3} parent=31 // pred_check_branch
        %541 = sbr.rel (%p539) target = $region44
      $region43: #{residual_block_forward.3} parent=31 // pred_region
        %s542 = smul.u32 8, %s19
      $region44: #{residual_block_forward.3} parent=31 // pred_fallthru
        _
    $region32: #{residual_block_forward.3} parent=5 // pred_fallthru
      _
    %p543 = scmp.le.s32.totalorder 2, %s9
    // Predicated region
    $region45: #{residual_block_forward.3} parent=5 // pred_check
      %p544 = pneg %p543
    $region46: #{residual_block_forward.3} parent=5 // pred_check_branch
      %546 = sbr.rel (%p544) target = $region48
    $region47: #{residual_block_forward.3} parent=5 // pred_region
      %s547 = ssub.s32 %s9, 2
      // Predicated region
      $region49: #{residual_block_forward.3} parent=47 // pred_check
        %p548 = pneg %p141
      $region50: #{residual_block_forward.3} parent=47 // pred_check_branch
        %550 = sbr.rel (%p548) target = $region52
      $region51: #{residual_block_forward.3} parent=47 // pred_region
        %s551 = smul.u32 8, %s22
        %p552 = scmp.lt.s32.totalorder %s551, 15
        %s553 = scalar_select %p552, %s551, 15
        %p554 = scmp.lt.s32.totalorder %s23, 0
        %s555 = scalar_select %p554, %s23, 0
        %s556 = sadd.s32 %s555, %s553
        %s557 = smul.addr %s556, 4
        %s558 = scalar_lea.vmem %s3, %s557
      $region52: #{residual_block_forward.3} parent=47 // pred_fallthru
        _
    $region48: #{residual_block_forward.3} parent=5 // pred_fallthru
      _
  $region6: #{residual_block_forward.3} parent=0 // loop_footer
    %s13 = sadd.s32 1, %s9
  $region7: #{residual_block_forward.3} parent=0 // loop_footer_branch
    %8 = sbr.rel target = $region3
  $region8: #{residual_block_forward.3} parent=0 // loop_exit
    _

// kernel: residual_block_forward.4
$region0: #{residual_block_forward.4}
  #allocation0 [shape = 'u32[]', space=smem, size = 0x4, offset = 0x4, fixed_abs, tag = 'smem constant byte address 0x4 - core index']
  #allocation1 [shape = 'u32[144,128]{1,0:T(1,128)}', space=vmem, size = 0x12000, scoped, tag = 'internal scratch']
  #allocation2 [shape = 'f32[64,128]{1,0:T(8,128)}', space=vmem, size = 0x8000, scoped, tag = 'scratch operand']
  %s0 = inlined_call_operand.vmem [shape: bf16[128,128], index: 0, kind: input, shape index: {}]
  %s1 = inlined_call_operand.vmem [shape: bf16[128,128], index: 1, kind: input, shape index: {}]
  %s2 = inlined_call_operand.vmem [shape: f32[1,128], index: 2, kind: input, shape index: {}]
  %s3 = inlined_call_operand.vmem [shape: bf16[128,128], index: 3, kind: output, shape index: {}]
  %s4 = sld [smem:[#allocation0]]
  $region53: #{residual_block_forward.4} parent=0
    _
  %s6 = ssub.s32 1, %s4
  %s7 = scalar_select 0, %s6, %s4
  loop: start=0, step=1, limit=4
  $region2: #{residual_block_forward.4} parent=0 // loop_pre_header
    _
  $region3: #{residual_block_forward.4} parent=0 // loop_header
    %s9 = sphi 0, %s13
    %p10 = scmp.ge.s32.totalorder %s9, 4
    %s16 = sphi 0, %s35
    %s17 = sphi 0, %s31
    %s18 = sphi 0, %s27
    %s19 = sphi 0, %s16
    %s20 = sphi 0, %s17
    %s21 = sphi 0, %s18
    %s22 = sphi 0, %s19
    %s23 = sphi 0, %s20
    %s24 = sphi 0, %s21
    %s40 = sphi 0, %s42
    %s43 = sphi 0, %s40
    %s44 = sphi 0, %s43
    %s60 = sphi 0, %s44
    %s68 = sphi 0, %s70
    %s71 = sphi 0, %s68
    %s72 = sphi 0, %s71
    %s88 = sphi 0, %s72
    %s94 = sphi 0, %s96
    %s97 = sphi 0, %s94
    %s98 = sphi 0, %s97
    %s114 = sphi 0, %s98
    %s122 = sphi 0, %s124
    %s125 = sphi 0, %s122
    %s126 = sphi 0, %s125
    %s142 = sphi 0, %s126
  $region4: #{residual_block_forward.4} parent=0 // loop_header_branch
    %12 = sbr.rel (%p10) target = $region8
  $region5: #{residual_block_forward.4} parent=0 // loop_body
    %s14 = ssub.s32 %s9, 1
    %s15 = ssub.s32 %s9, 2
    %s25 = sadd.s32 1, %s18
    %p26 = scmp.ge.s32.totalorder %s25, 1
    %s27 = scalar_select %p26, 0, %s25
    %s28 = sadd.s32 1, %s17
    %s29 = scalar_select %p26, %s28, %s17
    %p30 = scmp.ge.s32.totalorder %s29, 1
    %s31 = scalar_select %p30, 0, %s29
    %s32 = sadd.s32 1, %s16
    %s33 = scalar_select %p30, %s32, %s16
    %p34 = scmp.ge.s32.totalorder %s33, 2
    %s35 = scalar_select %p34, 0, %s33
    %s36 = ssub.s32 %s16, %s35
    %s37 = ssub.s32 %s18, %s27
    %s38 = sor.u32 %s36, %s37
    %p39 = scmp.eq.s32.totalorder %s38, 0
    %s41 = sadd.s32 %s40, 1
    %s42 = scalar_select %p39, %s40, %s41
    %p45 = pneg %p39
    %p46 = scmp.eq.s32.totalorder %s9, 1
    %p47 = por %p45, %p46
    %p48 = scmp.ne.s32.totalorder %s40, %s43
    %p49 = scmp.eq.s32.totalorder %s9, 0
    %p50 = por %p48, %p49
    %p51 = scmp.ne.s32.totalorder %s40, %s43
    %p52 = scmp.eq.s32.totalorder %s14, 1
    %p53 = por %p51, %p52
    %p54 = scmp.ne.s32.totalorder %s43, %s44
    %p55 = scmp.eq.s32.totalorder %s14, 0
    %p56 = por %p54, %p55
    %p57 = scmp.ne.s32.totalorder %s43, %s44
    %p58 = scmp.eq.s32.totalorder %s15, 1
    %p59 = por %p57, %p58
    %p61 = scmp.ne.s32.totalorder %s44, %s60
    %p62 = scmp.eq.s32.totalorder %s15, 0
    %p63 = por %p61, %p62
    %s64 = ssub.s32 %s18, %s27
    %s65 = ssub.s32 %s17, %s31
    %s66 = sor.u32 %s64, %s65
    %p67 = scmp.eq.s32.totalorder %s66, 0
    %s69 = sadd.s32 %s68, 1
    %s70 = scalar_select %p67, %s68, %s69
    %p73 = pneg %p67
    %p74 = scmp.eq.s32.totalorder %s9, 1
    %p75 = por %p73, %p74
    %p76 = scmp.ne.s32.totalorder %s68, %s71
    %p77 = scmp.eq.s32.totalorder %s9, 0
    %p78 = por %p76, %p77
    %p79 = scmp.ne.s32.totalorder %s68, %s71
    %p80 = scmp.eq.s32.totalorder %s14, 1
    %p81 = por %p79, %p80
    %p82 = scmp.ne.s32.totalorder %s71, %s72
    %p83 = scmp.eq.s32.totalorder %s14, 0
    %p84 = por %p82, %p83
    %p85 = scmp.ne.s32.totalorder %s71, %s72
    %p86 = scmp.eq.s32.totalorder %s15, 1
    %p87 = por %p85, %p86
    %p89 = scmp.ne.s32.totalorder %s72, %s88
    %p90 = scmp.eq.s32.totalorder %s15, 0
    %p91 = por %p89, %p90
    %s92 = ssub.s32 %s17, %s31
    %p93 = scmp.eq.s32.totalorder %s92, 0
    %s95 = sadd.s32 %s94, 1
    %s96 = scalar_select %p93, %s94, %s95
    %p99 = pneg %p93
    %p100 = scmp.eq.s32.totalorder %s9, 1
    %p101 = por %p99, %p100
    %p102 = scmp.ne.s32.totalorder %s94, %s97
    %p103 = scmp.eq.s32.totalorder %s9, 0
    %p104 = por %p102, %p103
    %p105 = scmp.ne.s32.totalorder %s94, %s97
    %p106 = scmp.eq.s32.totalorder %s14, 1
    %p107 = por %p105, %p106
    %p108 = scmp.ne.s32.totalorder %s97, %s98
    %p109 = scmp.eq.s32.totalorder %s14, 0
    %p110 = por %p108, %p109
    %p111 = scmp.ne.s32.totalorder %s97, %s98
    %p112 = scmp.eq.s32.totalorder %s15, 1
    %p113 = por %p111, %p112
    %p115 = scmp.ne.s32.totalorder %s98, %s114
    %p116 = scmp.eq.s32.totalorder %s15, 0
    %p117 = por %p115, %p116
    %s118 = ssub.s32 %s16, %s35
    %s119 = ssub.s32 %s17, %s31
    %s120 = sor.u32 %s118, %s119
    %p121 = scmp.eq.s32.totalorder %s120, 0
    %s123 = sadd.s32 %s122, 1
    %s124 = scalar_select %p121, %s122, %s123
    %p127 = pneg %p121
    %p128 = scmp.eq.s32.totalorder %s9, 1
    %p129 = por %p127, %p128
    %p130 = scmp.ne.s32.totalorder %s122, %s125
    %p131 = scmp.eq.s32.totalorder %s9, 0
    %p132 = por %p130, %p131
    %p133 = scmp.ne.s32.totalorder %s122, %s125
    %p134 = scmp.eq.s32.totalorder %s14, 1
    %p135 = por %p133, %p134
    %p136 = scmp.ne.s32.totalorder %s125, %s126
    %p137 = scmp.eq.s32.totalorder %s14, 0
    %p138 = por %p136, %p137
    %p139 = scmp.ne.s32.totalorder %s125, %s126
    %p140 = scmp.eq.s32.totalorder %s15, 1
    %p141 = por %p139, %p140
    %p143 = scmp.ne.s32.totalorder %s126, %s142
    %p144 = scmp.eq.s32.totalorder %s15, 0
    %p145 = por %p143, %p144
    %p146 = scmp.le.s32.totalorder 1, %s9
    %p147 = scmp.lt.s32.totalorder %s9, 3
    %p148 = pnand %p146, %p147
    %p149 = pneg %p148
    // Predicated region
    $region9: #{residual_block_forward.4} parent=5 // pred_check
      _
    $region10: #{residual_block_forward.4} parent=5 // pred_check_branch
      %151 = sbr.rel (%p148) target = $region12
    $region11: #{residual_block_forward.4} parent=5 // pred_region
      %s152 = ssub.s32 %s9, 1
      // Predicated region
      $region13: #{residual_block_forward.4} parent=11 // pred_check
        %p153 = pneg %p84
      $region14: #{residual_block_forward.4} parent=11 // pred_check_branch
        %155 = sbr.rel (%p153) target = $region16
      $region15: #{residual_block_forward.4} parent=11 // pred_region
        %s156 = smul.u32 16, %s21
        %p157 = scmp.lt.s32.totalorder %s156, 15
        %s158 = scalar_select %p157, %s156, 15
        %p159 = scmp.lt.s32.totalorder %s20, 0
        %s160 = scalar_select %p159, %s20, 0
        %s161 = sadd.s32 %s160, %s158
        %s162 = smul.addr %s161, 4
        %s163 = scalar_lea.vmem %s1, %s162
        %s164 = smul.u32 16, %s21
      $region16: #{residual_block_forward.4} parent=11 // pred_fallthru
        _
      // Predicated region
      $region17: #{residual_block_forward.4} parent=11 // pred_check
        %p165 = pneg %p110
      $region18: #{residual_block_forward.4} parent=11 // pred_check_branch
        %167 = sbr.rel (%p165) target = $region20
      $region19: #{residual_block_forward.4} parent=11 // pred_region
        %p168 = scmp.lt.s32.totalorder %s20, 0
        %s169 = scalar_select %p168, %s20, 0
        %s170 = scalar_lea.vmem %s2, %s169
      $region20: #{residual_block_forward.4} parent=11 // pred_fallthru
        _
    $region12: #{residual_block_forward.4} parent=5 // pred_fallthru
      _
    %p171 = scmp.lt.s32.totalorder %s9, 2
    // Predicated region
    $region21: #{residual_block_forward.4} parent=5 // pred_check
      %p172 = pneg %p171
    $region22: #{residual_block_forward.4} parent=5 // pred_check_branch
      %174 = sbr.rel (%p172) target = $region24
    $region23: #{residual_block_forward.4} parent=5 // pred_region
      // Predicated region
      $region25: #{residual_block_forward.4} parent=23 // pred_check
        %p175 = pneg %p50
      $region26: #{residual_block_forward.4} parent=23 // pred_check_branch
        %177 = sbr.rel (%p175) target = $region28
      $region27: #{residual_block_forward.4} parent=23 // pred_region
        %s178 = smul.u32 8, %s16
        %p179 = scmp.lt.s32.totalorder %s178, 15
        %s180 = scalar_select %p179, %s178, 15
        %p181 = scmp.lt.s32.totalorder %s18, 0
        %s182 = scalar_select %p181, %s18, 0
        %s183 = sadd.s32 %s182, %s180
        %s184 = smul.addr %s183, 4
        %s185 = scalar_lea.vmem %s0, %s184
        %s186 = smul.u32 8, %s16
      $region28: #{residual_block_forward.4} parent=23 // pred_fallthru
        _
    $region24: #{residual_block_forward.4} parent=5 // pred_fallthru
      _
    %p187 = scmp.le.s32.totalorder 1, %s9
    %p188 = scmp.lt.s32.totalorder %s9, 3
    %p189 = pnand %p187, %p188
    %p190 = pneg %p189
    // Predicated region
    $region29: #{residual_block_forward.4} parent=5 // pred_check
      _
    $region30: #{residual_block_forward.4} parent=5 // pred_check_branch
      %192 = sbr.rel (%p189) target = $region32
    $region31: #{residual_block_forward.4} parent=5 // pred_region
      %s193 = ssub.s32 %s9, 1
      %s194 = smul.u32 8, %s19
      %p195 = scmp.lt.s32.totalorder %s194, 15
      %s196 = scalar_select %p195, %s194, 15
      %p197 = scmp.lt.s32.totalorder %s21, 0
      %s198 = scalar_select %p197, %s21, 0
      %s199 = sadd.s32 %s198, %s196
      %s200 = smul.addr %s199, 4
      %s201 = scalar_lea.vmem %s0, %s200
      %p202 = pneg %p56
      %p203 = pneg %p53
      %s204 = smul.u32 16, %s21
      %p205 = scmp.lt.s32.totalorder %s204, 15
      %s206 = scalar_select %p205, %s204, 15
      %p207 = scmp.lt.s32.totalorder %s20, 0
      %s208 = scalar_select %p207, %s20, 0
      %s209 = sadd.s32 %s208, %s206
      %s210 = smul.addr %s209, 4
      %s211 = scalar_lea.vmem %s1, %s210
      %p212 = pneg %p84
      %p213 = pneg %p81
      %p214 = scmp.lt.s32.totalorder %s20, 0
      %s215 = scalar_select %p214, %s20, 0
      %s216 = scalar_lea.vmem %s2, %s215
      %p217 = pneg %p110
      %p218 = pneg %p107
      %p219 = pneg %p138
      %p220 = pneg %p135
      %s221 = smul.u32 8, %s19
      %p222 = scmp.lt.s32.totalorder %s221, 15
      %s223 = scalar_select %p222, %s221, 15
      %p224 = scmp.lt.s32.totalorder %s20, 0
      %s225 = scalar_select %p224, %s20, 0
      %s226 = sadd.s32 %s225, %s223
      %s227 = smul.addr %s226, 4
      %s228 = scalar_lea.vmem %s3, %s227
      %s229 = smul.u32 8, %s19
      %p230 = scmp.lt.s32.totalorder %s229, 15
      %s231 = scalar_select %p230, %s229, 15
      %p232 = scmp.lt.s32.totalorder %s21, 0
      %s233 = scalar_select %p232, %s21, 0
      %s234 = sadd.s32 %s233, %s231
      %s235 = smul.addr %s234, 4
      %s236 = scalar_lea.vmem %s0, %s235
      %s237 = smul.u32 8, %s19
      %s238 = smul.u32 16, %s21
      %p239 = scmp.lt.s32.totalorder %s238, 15
      %s240 = scalar_select %p239, %s238, 15
      %p241 = scmp.lt.s32.totalorder %s20, 0
      %s242 = scalar_select %p241, %s20, 0
      %s243 = sadd.s32 %s242, %s240
      %s244 = smul.addr %s243, 4
      %s245 = scalar_lea.vmem %s1, %s244
      %s246 = smul.u32 16, %s21
      %p247 = scmp.lt.s32.totalorder %s20, 0
      %s248 = scalar_select %p247, %s20, 0
      %s249 = scalar_lea.vmem %s2, %s248
      %s250 = smul.u32 8, %s19
      %p251 = scmp.lt.s32.totalorder %s250, 15
      %s252 = scalar_select %p251, %s250, 15
      %p253 = scmp.lt.s32.totalorder %s20, 0
      %s254 = scalar_select %p253, %s20, 0
      %s255 = sadd.s32 %s254, %s252
      %s256 = smul.addr %s255, 4
      %s257 = scalar_lea.vmem %s3, %s256
      %s258 = smul.u32 8, %s19
      %p260 = scmp.eq.s32.totalorder %s21, 0
      // Predicated region
      $region33: #{residual_block_forward.4} parent=31 // pred_check
        %p261 = pneg %p260
      $region34: #{residual_block_forward.4} parent=31 // pred_check_branch
        %263 = sbr.rel (%p261) target = $region36
      $region35: #{residual_block_forward.4} parent=31 // pred_region
        %264 = vst [vmem:[#allocation2] sm:$0xff] 0.0
        %265 = vst [vmem:[#allocation2 + $0x8] sm:$0xff] 0.0
        %266 = vst [vmem:[#allocation2 + $0x10] sm:$0xff] 0.0
        %267 = vst [vmem:[#allocation2 + $0x18] sm:$0xff] 0.0
        %268 = vst [vmem:[#allocation2 + $0x20] sm:$0xff] 0.0
        %269 = vst [vmem:[#allocation2 + $0x28] sm:$0xff] 0.0
        %270 = vst [vmem:[#allocation2 + $0x30] sm:$0xff] 0.0
        %271 = vst [vmem:[#allocation2 + $0x38] sm:$0xff] 0.0
      $region36: #{residual_block_forward.4} parent=31 // pred_fallthru
        _
      %v272 = vld [vmem:[#allocation2] sm:$0xff]
      %v273 = vld [vmem:[#allocation2 + $0x8] sm:$0xff]
      %v274 = vld [vmem:[#allocation2 + $0x10] sm:$0xff]
      %v275 = vld [vmem:[#allocation2 + $0x18] sm:$0xff]
      %v276 = vld [vmem:[#allocation2 + $0x20] sm:$0xff]
      %v277 = vld [vmem:[#allocation2 + $0x28] sm:$0xff]
      %v278 = vld [vmem:[#allocation2 + $0x30] sm:$0xff]
      %v279 = vld [vmem:[#allocation2 + $0x38] sm:$0xff]
      %v280 = vld [vmem:[%s236] sm:$0xf]
      %v281 = vld [vmem:[%s236 + $0x4] sm:$0xf]
      %v282 = vld [vmem:[%s236 + $0x8] sm:$0xf]
      %v283 = vld [vmem:[%s236 + $0xc] sm:$0xf]
      %v284 = vld [vmem:[%s236 + $0x10] sm:$0xf]
      %v285 = vld [vmem:[%s236 + $0x14] sm:$0xf]
      %v286 = vld [vmem:[%s236 + $0x18] sm:$0xf]
      %v287 = vld [vmem:[%s236 + $0x1c] sm:$0xf]
      %v288 = vld [vmem:[%s245] sm:$0xf]
      %v289 = vld [vmem:[%s245 + $0x4] sm:$0xf]
      %v290 = vld [vmem:[%s245 + $0x8] sm:$0xf]
      %v291 = vld [vmem:[%s245 + $0xc] sm:$0xf]
      %v292 = vld [vmem:[%s245 + $0x10] sm:$0xf]
      %v293 = vld [vmem:[%s245 + $0x14] sm:$0xf]
      %v294 = vld [vmem:[%s245 + $0x18] sm:$0xf]
      %v295 = vld [vmem:[%s245 + $0x1c] sm:$0xf]
      %v296 = vld [vmem:[%s245 + $0x20] sm:$0xf]
      %v297 = vld [vmem:[%s245 + $0x24] sm:$0xf]
      %v298 = vld [vmem:[%s245 + $0x28] sm:$0xf]
      %v299 = vld [vmem:[%s245 + $0x2c] sm:$0xf]
      %v300 = vld [vmem:[%s245 + $0x30] sm:$0xf]
      %v301 = vld [vmem:[%s245 + $0x34] sm:$0xf]
      %v302 = vld [vmem:[%s245 + $0x38] sm:$0xf]
      %v303 = vld [vmem:[%s245 + $0x3c] sm:$0xf]
      %v312 = vunpack.c.l.b16 %v280
      %v313 = vunpack.c.l.b16 %v281
      %v314 = vunpack.c.l.b16 %v282
      %v315 = vunpack.c.l.b16 %v283
      %v316 = vunpack.c.l.b16 %v284
      %v317 = vunpack.c.l.b16 %v285
      %v318 = vunpack.c.l.b16 %v286
      %v319 = vunpack.c.l.b16 %v287
      %v320 = vpack.c.b16 %v313, %v312
      %v321 = vpack.c.b16 %v315, %v314
      %v322 = vpack.c.b16 %v317, %v316
      %v323 = vpack.c.b16 %v319, %v318
      %v344 = vunpack.c.l.b16 %v288
      %v345 = vunpack.c.l.b16 %v289
      %v346 = vunpack.c.l.b16 %v290
      %v347 = vunpack.c.l.b16 %v291
      %v348 = vunpack.c.l.b16 %v292
      %v349 = vunpack.c.l.b16 %v293
      %v350 = vunpack.c.l.b16 %v294
      %v351 = vunpack.c.l.b16 %v295
      %v352 = vunpack.c.l.b16 %v296
      %v353 = vunpack.c.l.b16 %v297
      %v354 = vunpack.c.l.b16 %v298
      %v355 = vunpack.c.l.b16 %v299
      %v356 = vunpack.c.l.b16 %v300
      %v357 = vunpack.c.l.b16 %v301
      %v358 = vunpack.c.l.b16 %v302
      %v359 = vunpack.c.l.b16 %v303
      %v360 = vpack.c.b16 %v345, %v344
      %v361 = vpack.c.b16 %v347, %v346
      %v362 = vpack.c.b16 %v349, %v348
      %v363 = vpack.c.b16 %v351, %v350
      %v364 = vpack.c.b16 %v353, %v352
      %v365 = vpack.c.b16 %v355, %v354
      %v366 = vpack.c.b16 %v357, %v356
      %v367 = vpack.c.b16 %v359, %v358
      %376 = vmatprep.subr.bf16.mxu0 0
      %377 = vmatpush1.bf16.msra.mxu0 %v367
      %378 = vmatprep.subr.bf16.mxu0 0
      %379 = vmatpush1.bf16.msra.mxu0 %v366
      %380 = vmatprep.subr.bf16.mxu0 0
      %381 = vmatpush1.bf16.msra.mxu0 %v365
      %382 = vmatprep.subr.bf16.mxu0 0
      %383 = vmatpush1.bf16.msra.mxu0 %v364
      %384 = vmatprep.subr.bf16.mxu0 0
      %385 = vmatpush1.bf16.msra.mxu0 %v363
      %386 = vmatprep.subr.bf16.mxu0 0
      %387 = vmatpush1.bf16.msra.mxu0 %v362
      %388 = vmatprep.subr.bf16.mxu0 0
      %389 = vmatpush1.bf16.msra.mxu0 %v361
      %390 = vmatprep.subr.bf16.mxu0 0
      %391 = vmatpush1.bf16.msra.mxu0 %v360
      %392 = vmatprep.subr.bf16.mxu0 0
      %393 = vmatpush2.bf16.msra.mxu0 0
      %394 = vmatprep.subr.bf16.mxu0 0
      %395 = vmatpush2.bf16.msra.mxu0 0
      %396 = vmatprep.subr.bf16.mxu0 0
      %397 = vmatpush2.bf16.msra.mxu0 0
      %398 = vmatprep.subr.bf16.mxu0 0
      %399 = vmatpush2.bf16.msra.mxu0 0
      %400 = vmatprep.subr.bf16.mxu0 0
      %401 = vmatpush2.bf16.msra.mxu0 0
      %402 = vmatprep.subr.bf16.mxu0 0
      %403 = vmatpush2.bf16.msra.mxu0 0
      %404 = vmatprep.subr.bf16.mxu0 0
      %405 = vmatpush2.bf16.msra.mxu0 0
      %406 = vmatprep.subr.bf16.mxu0 0
      %407 = vmatpush2.bf16.msra.mxu0 0
      %408 = vmatprep.mubr.bf16.mxu0 0
      %409 = vmatmul.mubr.bf16.gmra.mxu0 %v320
      %v410 = vpop.f32.mrf.mxu0
      %v411 = vadd.f32 0.0, %v410
      %v412 = vpop.f32.mrf.mxu0
      %v413 = vpop.f32.mrf.mxu0
      %v414 = vadd.f32 0.0, %v413
      %v415 = vpop.f32.mrf.mxu0
      %416 = vmatprep.mubr.bf16.mxu0 0
      %417 = vmatmul.mubr.bf16.gmra.mxu0 %v321
      %v418 = vpop.f32.mrf.mxu0
      %v419 = vadd.f32 0.0, %v418
      %v420 = vpop.f32.mrf.mxu0
      %v421 = vpop.f32.mrf.mxu0
      %v422 = vadd.f32 0.0, %v421
      %v423 = vpop.f32.mrf.mxu0
      %424 = vmatprep.mubr.bf16.mxu0 0
      %425 = vmatmul.mubr.bf16.gmra.mxu0 %v322
      %v426 = vpop.f32.mrf.mxu0
      %v427 = vadd.f32 0.0, %v426
      %v428 = vpop.f32.mrf.mxu0
      %v429 = vpop.f32.mrf.mxu0
      %v430 = vadd.f32 0.0, %v429
      %v431 = vpop.f32.mrf.mxu0
      %432 = vmatprep.mubr.bf16.mxu0 0
      %433 = vmatmul.mubr.bf16.gmra.mxu0 %v323
      %v434 = vpop.f32.mrf.mxu0
      %v435 = vadd.f32 0.0, %v434
      %v436 = vpop.f32.mrf.mxu0
      %v437 = vpop.f32.mrf.mxu0
      %v438 = vadd.f32 0.0, %v437
      %v439 = vpop.f32.mrf.mxu0
      %440 = vdwg.mxu0
      %v441 = vadd.f32 %v272, %v411
      %v442 = vadd.f32 %v273, %v414
      %v443 = vadd.f32 %v274, %v419
      %v444 = vadd.f32 %v275, %v422
      %v445 = vadd.f32 %v276, %v427
      %v446 = vadd.f32 %v277, %v430
      %v447 = vadd.f32 %v278, %v435
      %v448 = vadd.f32 %v279, %v438
      %449 = vst [vmem:[#allocation2] sm:$0xff] %v441
      %450 = vst [vmem:[#allocation2 + $0x8] sm:$0xff] %v442
      %451 = vst [vmem:[#allocation2 + $0x10] sm:$0xff] %v443
      %452 = vst [vmem:[#allocation2 + $0x18] sm:$0xff] %v444
      %453 = vst [vmem:[#allocation2 + $0x20] sm:$0xff] %v445
      %454 = vst [vmem:[#allocation2 + $0x28] sm:$0xff] %v446
      %455 = vst [vmem:[#allocation2 + $0x30] sm:$0xff] %v447
      %456 = vst [vmem:[#allocation2 + $0x38] sm:$0xff] %v448
      // Predicated region
      $region37: #{residual_block_forward.4} parent=31 // pred_check
        %p457 = pneg %p260
      $region38: #{residual_block_forward.4} parent=31 // pred_check_branch
        %459 = sbr.rel (%p457) target = $region40
      $region39: #{residual_block_forward.4} parent=31 // pred_region
        %v460 = vld [vmem:[#allocation2] sm:$0xff]
        %v461 = vld [vmem:[#allocation2 + $0x8] sm:$0xff]
        %v462 = vld [vmem:[#allocation2 + $0x10] sm:$0xff]
        %v463 = vld [vmem:[#allocation2 + $0x18] sm:$0xff]
        %v464 = vld [vmem:[#allocation2 + $0x20] sm:$0xff]
        %v465 = vld [vmem:[#allocation2 + $0x28] sm:$0xff]
        %v466 = vld [vmem:[#allocation2 + $0x30] sm:$0xff]
        %v467 = vld [vmem:[#allocation2 + $0x38] sm:$0xff]
        %v468 = vld [vmem:[%s249] sm:$0x1]
        %v470 = vlaneseq
        %v471 = vshrl.u32 %v470, 7
        %v472 = vsub.s32 0, %v471
        %v473 = vrot.slane %v468, %v472
        %v475 = vadd.f32 %v460, %v473
        %v476 = vadd.f32 %v461, %v473
        %v477 = vadd.f32 %v462, %v473
        %v478 = vadd.f32 %v463, %v473
        %v479 = vadd.f32 %v464, %v473
        %v480 = vadd.f32 %v465, %v473
        %v481 = vadd.f32 %v466, %v473
        %v482 = vadd.f32 %v467, %v473
        %v483 = vpack.c.bf16 %v476, %v475
        %v484 = vpack.c.bf16 %v478, %v477
        %v485 = vpack.c.bf16 %v480, %v479
        %v486 = vpack.c.bf16 %v482, %v481
        %v491 = vunpack.c.l.b16 %v483
        %v492 = vunpack.c.h.b16 %v483
        %v493 = vunpack.c.l.b16 %v484
        %v494 = vunpack.c.h.b16 %v484
        %v495 = vunpack.c.l.b16 %v485
        %v496 = vunpack.c.h.b16 %v485
        %v497 = vunpack.c.l.b16 %v486
        %v498 = vunpack.c.h.b16 %v486
        %v499 = vpack.c.b16 %v491, %v491
        %v500 = vpack.c.b16 %v492, %v492
        %v501 = vpack.c.b16 %v493, %v493
        %v502 = vpack.c.b16 %v494, %v494
        %v503 = vpack.c.b16 %v495, %v495
        %v504 = vpack.c.b16 %v496, %v496
        %v505 = vpack.c.b16 %v497, %v497
        %v506 = vpack.c.b16 %v498, %v498
        %515 = vst [vmem:[%s257] sm:$0xf] %v499
        %516 = vst [vmem:[%s257 + $0x4] sm:$0xf] %v500
        %517 = vst [vmem:[%s257 + $0x8] sm:$0xf] %v501
        %518 = vst [vmem:[%s257 + $0xc] sm:$0xf] %v502
        %519 = vst [vmem:[%s257 + $0x10] sm:$0xf] %v503
        %520 = vst [vmem:[%s257 + $0x14] sm:$0xf] %v504
        %521 = vst [vmem:[%s257 + $0x18] sm:$0xf] %v505
        %522 = vst [vmem:[%s257 + $0x1c] sm:$0xf] %v506
      $region40: #{residual_block_forward.4} parent=31 // pred_fallthru
        _
      %s523 = smul.u32 8, %s19
      %p524 = scmp.lt.s32.totalorder %s523, 15
      %s525 = scalar_select %p524, %s523, 15
      %p526 = scmp.lt.s32.totalorder %s20, 0
      %s527 = scalar_select %p526, %s20, 0
      %s528 = sadd.s32 %s527, %s525
      %s529 = smul.addr %s528, 4
      %s530 = scalar_lea.vmem %s3, %s529
      // Predicated region
      $region41: #{residual_block_forward.4} parent=31 // pred_check
        %p531 = pneg %p135
      $region42: #{residual_block_forward.4} parent=31 // pred_check_branch
        %533 = sbr.rel (%p531) target = $region44
      $region43: #{residual_block_forward.4} parent=31 // pred_region
        %s534 = smul.u32 8, %s19
      $region44: #{residual_block_forward.4} parent=31 // pred_fallthru
        _
    $region32: #{residual_block_forward.4} parent=5 // pred_fallthru
      _
    %p535 = scmp.le.s32.totalorder 2, %s9
    // Predicated region
    $region45: #{residual_block_forward.4} parent=5 // pred_check
      %p536 = pneg %p535
    $region46: #{residual_block_forward.4} parent=5 // pred_check_branch
      %538 = sbr.rel (%p536) target = $region48
    $region47: #{residual_block_forward.4} parent=5 // pred_region
      %s539 = ssub.s32 %s9, 2
      // Predicated region
      $region49: #{residual_block_forward.4} parent=47 // pred_check
        %p540 = pneg %p141
      $region50: #{residual_block_forward.4} parent=47 // pred_check_branch
        %542 = sbr.rel (%p540) target = $region52
      $region51: #{residual_block_forward.4} parent=47 // pred_region
        %s543 = smul.u32 8, %s22
        %p544 = scmp.lt.s32.totalorder %s543, 15
        %s545 = scalar_select %p544, %s543, 15
        %p546 = scmp.lt.s32.totalorder %s23, 0
        %s547 = scalar_select %p546, %s23, 0
        %s548 = sadd.s32 %s547, %s545
        %s549 = smul.addr %s548, 4
        %s550 = scalar_lea.vmem %s3, %s549
      $region52: #{residual_block_forward.4} parent=47 // pred_fallthru
        _
    $region48: #{residual_block_forward.4} parent=5 // pred_fallthru
      _
  $region6: #{residual_block_forward.4} parent=0 // loop_footer
    %s13 = sadd.s32 1, %s9
  $region7: #{residual_block_forward.4} parent=0 // loop_footer_branch
    %8 = sbr.rel target = $region3
  $region8: #{residual_block_forward.4} parent=0 // loop_exit
    _

// kernel: residual_block_forward.5
$region0: #{residual_block_forward.5}
  #allocation0 [shape = 'u32[]', space=smem, size = 0x4, offset = 0x4, fixed_abs, tag = 'smem constant byte address 0x4 - core index']
  #allocation1 [shape = 'u32[144,128]{1,0:T(1,128)}', space=vmem, size = 0x12000, scoped, tag = 'internal scratch']
  #allocation2 [shape = 'f32[64,128]{1,0:T(8,128)}', space=vmem, size = 0x8000, scoped, tag = 'scratch operand']
  %s0 = inlined_call_operand.vmem [shape: bf16[128,128], index: 0, kind: input, shape index: {}]
  %s1 = inlined_call_operand.vmem [shape: bf16[128,128], index: 1, kind: input, shape index: {}]
  %s2 = inlined_call_operand.vmem [shape: f32[1,128], index: 2, kind: input, shape index: {}]
  %s3 = inlined_call_operand.vmem [shape: bf16[128,128], index: 3, kind: input, shape index: {}]
  %s4 = inlined_call_operand.vmem [shape: f32[128,128], index: 4, kind: output, shape index: {}]
  %s5 = sld [smem:[#allocation0]]
  $region57: #{residual_block_forward.5} parent=0
    _
  %s7 = ssub.s32 1, %s5
  %s8 = scalar_select 0, %s7, %s5
  loop: start=0, step=1, limit=4
  $region2: #{residual_block_forward.5} parent=0 // loop_pre_header
    _
  $region3: #{residual_block_forward.5} parent=0 // loop_header
    %s10 = sphi 0, %s14
    %p11 = scmp.ge.s32.totalorder %s10, 4
    %s17 = sphi 0, %s36
    %s18 = sphi 0, %s32
    %s19 = sphi 0, %s28
    %s20 = sphi 0, %s17
    %s21 = sphi 0, %s18
    %s22 = sphi 0, %s19
    %s23 = sphi 0, %s20
    %s24 = sphi 0, %s21
    %s25 = sphi 0, %s22
    %s41 = sphi 0, %s43
    %s44 = sphi 0, %s41
    %s45 = sphi 0, %s44
    %s61 = sphi 0, %s45
    %s69 = sphi 0, %s71
    %s72 = sphi 0, %s69
    %s73 = sphi 0, %s72
    %s89 = sphi 0, %s73
    %s95 = sphi 0, %s97
    %s98 = sphi 0, %s95
    %s99 = sphi 0, %s98
    %s115 = sphi 0, %s99
    %s123 = sphi 0, %s125
    %s126 = sphi 0, %s123
    %s127 = sphi 0, %s126
    %s143 = sphi 0, %s127
    %s151 = sphi 0, %s153
    %s154 = sphi 0, %s151
    %s155 = sphi 0, %s154
    %s171 = sphi 0, %s155
  $region4: #{residual_block_forward.5} parent=0 // loop_header_branch
    %13 = sbr.rel (%p11) target = $region8
  $region5: #{residual_block_forward.5} parent=0 // loop_body
    %s15 = ssub.s32 %s10, 1
    %s16 = ssub.s32 %s10, 2
    %s26 = sadd.s32 1, %s19
    %p27 = scmp.ge.s32.totalorder %s26, 1
    %s28 = scalar_select %p27, 0, %s26
    %s29 = sadd.s32 1, %s18
    %s30 = scalar_select %p27, %s29, %s18
    %p31 = scmp.ge.s32.totalorder %s30, 1
    %s32 = scalar_select %p31, 0, %s30
    %s33 = sadd.s32 1, %s17
    %s34 = scalar_select %p31, %s33, %s17
    %p35 = scmp.ge.s32.totalorder %s34, 2
    %s36 = scalar_select %p35, 0, %s34
    %s37 = ssub.s32 %s17, %s36
    %s38 = ssub.s32 %s19, %s28
    %s39 = sor.u32 %s37, %s38
    %p40 = scmp.eq.s32.totalorder %s39, 0
    %s42 = sadd.s32 %s41, 1
    %s43 = scalar_select %p40, %s41, %s42
    %p46 = pneg %p40
    %p47 = scmp.eq.s32.totalorder %s10, 1
    %p48 = por %p46, %p47
    %p49 = scmp.ne.s32.totalorder %s41, %s44
    %p50 = scmp.eq.s32.totalorder %s10, 0
    %p51 = por %p49, %p50
    %p52 = scmp.ne.s32.totalorder %s41, %s44
    %p53 = scmp.eq.s32.totalorder %s15, 1
    %p54 = por %p52, %p53
    %p55 = scmp.ne.s32.totalorder %s44, %s45
    %p56 = scmp.eq.s32.totalorder %s15, 0
    %p57 = por %p55, %p56
    %p58 = scmp.ne.s32.totalorder %s44, %s45
    %p59 = scmp.eq.s32.totalorder %s16, 1
    %p60 = por %p58, %p59
    %p62 = scmp.ne.s32.totalorder %s45, %s61
    %p63 = scmp.eq.s32.totalorder %s16, 0
    %p64 = por %p62, %p63
    %s65 = ssub.s32 %s19, %s28
    %s66 = ssub.s32 %s18, %s32
    %s67 = sor.u32 %s65, %s66
    %p68 = scmp.eq.s32.totalorder %s67, 0
    %s70 = sadd.s32 %s69, 1
    %s71 = scalar_select %p68, %s69, %s70
    %p74 = pneg %p68
    %p75 = scmp.eq.s32.totalorder %s10, 1
    %p76 = por %p74, %p75
    %p77 = scmp.ne.s32.totalorder %s69, %s72
    %p78 = scmp.eq.s32.totalorder %s10, 0
    %p79 = por %p77, %p78
    %p80 = scmp.ne.s32.totalorder %s69, %s72
    %p81 = scmp.eq.s32.totalorder %s15, 1
    %p82 = por %p80, %p81
    %p83 = scmp.ne.s32.totalorder %s72, %s73
    %p84 = scmp.eq.s32.totalorder %s15, 0
    %p85 = por %p83, %p84
    %p86 = scmp.ne.s32.totalorder %s72, %s73
    %p87 = scmp.eq.s32.totalorder %s16, 1
    %p88 = por %p86, %p87
    %p90 = scmp.ne.s32.totalorder %s73, %s89
    %p91 = scmp.eq.s32.totalorder %s16, 0
    %p92 = por %p90, %p91
    %s93 = ssub.s32 %s18, %s32
    %p94 = scmp.eq.s32.totalorder %s93, 0
    %s96 = sadd.s32 %s95, 1
    %s97 = scalar_select %p94, %s95, %s96
    %p100 = pneg %p94
    %p101 = scmp.eq.s32.totalorder %s10, 1
    %p102 = por %p100, %p101
    %p103 = scmp.ne.s32.totalorder %s95, %s98
    %p104 = scmp.eq.s32.totalorder %s10, 0
    %p105 = por %p103, %p104
    %p106 = scmp.ne.s32.totalorder %s95, %s98
    %p107 = scmp.eq.s32.totalorder %s15, 1
    %p108 = por %p106, %p107
    %p109 = scmp.ne.s32.totalorder %s98, %s99
    %p110 = scmp.eq.s32.totalorder %s15, 0
    %p111 = por %p109, %p110
    %p112 = scmp.ne.s32.totalorder %s98, %s99
    %p113 = scmp.eq.s32.totalorder %s16, 1
    %p114 = por %p112, %p113
    %p116 = scmp.ne.s32.totalorder %s99, %s115
    %p117 = scmp.eq.s32.totalorder %s16, 0
    %p118 = por %p116, %p117
    %s119 = ssub.s32 %s17, %s36
    %s120 = ssub.s32 %s18, %s32
    %s121 = sor.u32 %s119, %s120
    %p122 = scmp.eq.s32.totalorder %s121, 0
    %s124 = sadd.s32 %s123, 1
    %s125 = scalar_select %p122, %s123, %s124
    %p128 = pneg %p122
    %p129 = scmp.eq.s32.totalorder %s10, 1
    %p130 = por %p128, %p129
    %p131 = scmp.ne.s32.totalorder %s123, %s126
    %p132 = scmp.eq.s32.totalorder %s10, 0
    %p133 = por %p131, %p132
    %p134 = scmp.ne.s32.totalorder %s123, %s126
    %p135 = scmp.eq.s32.totalorder %s15, 1
    %p136 = por %p134, %p135
    %p137 = scmp.ne.s32.totalorder %s126, %s127
    %p138 = scmp.eq.s32.totalorder %s15, 0
    %p139 = por %p137, %p138
    %p140 = scmp.ne.s32.totalorder %s126, %s127
    %p141 = scmp.eq.s32.totalorder %s16, 1
    %p142 = por %p140, %p141
    %p144 = scmp.ne.s32.totalorder %s127, %s143
    %p145 = scmp.eq.s32.totalorder %s16, 0
    %p146 = por %p144, %p145
    %s147 = ssub.s32 %s17, %s36
    %s148 = ssub.s32 %s18, %s32
    %s149 = sor.u32 %s147, %s148
    %p150 = scmp.eq.s32.totalorder %s149, 0
    %s152 = sadd.s32 %s151, 1
    %s153 = scalar_select %p150, %s151, %s152
    %p156 = pneg %p150
    %p157 = scmp.eq.s32.totalorder %s10, 1
    %p158 = por %p156, %p157
    %p159 = scmp.ne.s32.totalorder %s151, %s154
    %p160 = scmp.eq.s32.totalorder %s10, 0
    %p161 = por %p159, %p160
    %p162 = scmp.ne.s32.totalorder %s151, %s154
    %p163 = scmp.eq.s32.totalorder %s15, 1
    %p164 = por %p162, %p163
    %p165 = scmp.ne.s32.totalorder %s154, %s155
    %p166 = scmp.eq.s32.totalorder %s15, 0
    %p167 = por %p165, %p166
    %p168 = scmp.ne.s32.totalorder %s154, %s155
    %p169 = scmp.eq.s32.totalorder %s16, 1
    %p170 = por %p168, %p169
    %p172 = scmp.ne.s32.totalorder %s155, %s171
    %p173 = scmp.eq.s32.totalorder %s16, 0
    %p174 = por %p172, %p173
    %p175 = scmp.le.s32.totalorder 1, %s10
    %p176 = scmp.lt.s32.totalorder %s10, 3
    %p177 = pnand %p175, %p176
    %p178 = pneg %p177
    // Predicated region
    $region9: #{residual_block_forward.5} parent=5 // pred_check
      _
    $region10: #{residual_block_forward.5} parent=5 // pred_check_branch
      %180 = sbr.rel (%p177) target = $region12
    $region11: #{residual_block_forward.5} parent=5 // pred_region
      %s181 = ssub.s32 %s10, 1
      // Predicated region
      $region13: #{residual_block_forward.5} parent=11 // pred_check
        %p182 = pneg %p85
      $region14: #{residual_block_forward.5} parent=11 // pred_check_branch
        %184 = sbr.rel (%p182) target = $region16
      $region15: #{residual_block_forward.5} parent=11 // pred_region
        %s185 = smul.u32 16, %s22
        %p186 = scmp.lt.s32.totalorder %s185, 15
        %s187 = scalar_select %p186, %s185, 15
        %p188 = scmp.lt.s32.totalorder %s21, 0
        %s189 = scalar_select %p188, %s21, 0
        %s190 = sadd.s32 %s189, %s187
        %s191 = smul.addr %s190, 4
        %s192 = scalar_lea.vmem %s1, %s191
        %s193 = smul.u32 16, %s22
      $region16: #{residual_block_forward.5} parent=11 // pred_fallthru
        _
      // Predicated region
      $region17: #{residual_block_forward.5} parent=11 // pred_check
        %p194 = pneg %p111
      $region18: #{residual_block_forward.5} parent=11 // pred_check_branch
        %196 = sbr.rel (%p194) target = $region20
      $region19: #{residual_block_forward.5} parent=11 // pred_region
        %p197 = scmp.lt.s32.totalorder %s21, 0
        %s198 = scalar_select %p197, %s21, 0
        %s199 = scalar_lea.vmem %s2, %s198
      $region20: #{residual_block_forward.5} parent=11 // pred_fallthru
        _
    $region12: #{residual_block_forward.5} parent=5 // pred_fallthru
      _
    %p200 = scmp.lt.s32.totalorder %s10, 2
    // Predicated region
    $region21: #{residual_block_forward.5} parent=5 // pred_check
      %p201 = pneg %p200
    $region22: #{residual_block_forward.5} parent=5 // pred_check_branch
      %203 = sbr.rel (%p201) target = $region24
    $region23: #{residual_block_forward.5} parent=5 // pred_region
      // Predicated region
      $region25: #{residual_block_forward.5} parent=23 // pred_check
        %p204 = pneg %p51
      $region26: #{residual_block_forward.5} parent=23 // pred_check_branch
        %206 = sbr.rel (%p204) target = $region28
      $region27: #{residual_block_forward.5} parent=23 // pred_region
        %s207 = smul.u32 8, %s17
        %p208 = scmp.lt.s32.totalorder %s207, 15
        %s209 = scalar_select %p208, %s207, 15
        %p210 = scmp.lt.s32.totalorder %s19, 0
        %s211 = scalar_select %p210, %s19, 0
        %s212 = sadd.s32 %s211, %s209
        %s213 = smul.addr %s212, 4
        %s214 = scalar_lea.vmem %s0, %s213
        %s215 = smul.u32 8, %s17
      $region28: #{residual_block_forward.5} parent=23 // pred_fallthru
        _
      // Predicated region
      $region29: #{residual_block_forward.5} parent=23 // pred_check
        %p216 = pneg %p133
      $region30: #{residual_block_forward.5} parent=23 // pred_check_branch
        %218 = sbr.rel (%p216) target = $region32
      $region31: #{residual_block_forward.5} parent=23 // pred_region
        %s219 = smul.u32 8, %s17
        %p220 = scmp.lt.s32.totalorder %s219, 15
        %s221 = scalar_select %p220, %s219, 15
        %p222 = scmp.lt.s32.totalorder %s18, 0
        %s223 = scalar_select %p222, %s18, 0
        %s224 = sadd.s32 %s223, %s221
        %s225 = smul.addr %s224, 4
        %s226 = scalar_lea.vmem %s3, %s225
        %s227 = smul.u32 8, %s17
      $region32: #{residual_block_forward.5} parent=23 // pred_fallthru
        _
    $region24: #{residual_block_forward.5} parent=5 // pred_fallthru
      _
    %p228 = scmp.le.s32.totalorder 1, %s10
    %p229 = scmp.lt.s32.totalorder %s10, 3
    %p230 = pnand %p228, %p229
    %p231 = pneg %p230
    // Predicated region
    $region33: #{residual_block_forward.5} parent=5 // pred_check
      _
    $region34: #{residual_block_forward.5} parent=5 // pred_check_branch
      %233 = sbr.rel (%p230) target = $region36
    $region35: #{residual_block_forward.5} parent=5 // pred_region
      %s234 = ssub.s32 %s10, 1
      %s235 = smul.u32 8, %s20
      %p236 = scmp.lt.s32.totalorder %s235, 15
      %s237 = scalar_select %p236, %s235, 15
      %p238 = scmp.lt.s32.totalorder %s22, 0
      %s239 = scalar_select %p238, %s22, 0
      %s240 = sadd.s32 %s239, %s237
      %s241 = smul.addr %s240, 4
      %s242 = scalar_lea.vmem %s0, %s241
      %p243 = pneg %p57
      %p244 = pneg %p54
      %s245 = smul.u32 16, %s22
      %p246 = scmp.lt.s32.totalorder %s245, 15
      %s247 = scalar_select %p246, %s245, 15
      %p248 = scmp.lt.s32.totalorder %s21, 0
      %s249 = scalar_select %p248, %s21, 0
      %s250 = sadd.s32 %s249, %s247
      %s251 = smul.addr %s250, 4
      %s252 = scalar_lea.vmem %s1, %s251
      %p253 = pneg %p85
      %p254 = pneg %p82
      %p255 = scmp.lt.s32.totalorder %s21, 0
      %s256 = scalar_select %p255, %s21, 0
      %s257 = scalar_lea.vmem %s2, %s256
      %p258 = pneg %p111
      %p259 = pneg %p108
      %s260 = smul.u32 8, %s20
      %p261 = scmp.lt.s32.totalorder %s260, 15
      %s262 = scalar_select %p261, %s260, 15
      %p263 = scmp.lt.s32.totalorder %s21, 0
      %s264 = scalar_select %p263, %s21, 0
      %s265 = sadd.s32 %s264, %s262
      %s266 = smul.addr %s265, 4
      %s267 = scalar_lea.vmem %s3, %s266
      %p268 = pneg %p139
      %p269 = pneg %p136
      %p270 = pneg %p167
      %p271 = pneg %p164
      %s272 = smul.u32 8, %s20
      %p273 = scmp.lt.s32.totalorder %s272, 15
      %s274 = scalar_select %p273, %s272, 15
      %p275 = scmp.lt.s32.totalorder %s21, 0
      %s276 = scalar_select %p275, %s21, 0
      %s277 = sadd.s32 %s276, %s274
      %s278 = smul.addr %s277, 8
      %s279 = scalar_lea.vmem %s4, %s278
      %s280 = smul.u32 8, %s20
      %p281 = scmp.lt.s32.totalorder %s280, 15
      %s282 = scalar_select %p281, %s280, 15
      %p283 = scmp.lt.s32.totalorder %s22, 0
      %s284 = scalar_select %p283, %s22, 0
      %s285 = sadd.s32 %s284, %s282
      %s286 = smul.addr %s285, 4
      %s287 = scalar_lea.vmem %s0, %s286
      %s288 = smul.u32 8, %s20
      %s289 = smul.u32 16, %s22
      %p290 = scmp.lt.s32.totalorder %s289, 15
      %s291 = scalar_select %p290, %s289, 15
      %p292 = scmp.lt.s32.totalorder %s21, 0
      %s293 = scalar_select %p292, %s21, 0
      %s294 = sadd.s32 %s293, %s291
      %s295 = smul.addr %s294, 4
      %s296 = scalar_lea.vmem %s1, %s295
      %s297 = smul.u32 16, %s22
      %p298 = scmp.lt.s32.totalorder %s21, 0
      %s299 = scalar_select %p298, %s21, 0
      %s300 = scalar_lea.vmem %s2, %s299
      %s301 = smul.u32 8, %s20
      %p302 = scmp.lt.s32.totalorder %s301, 15
      %s303 = scalar_select %p302, %s301, 15
      %p304 = scmp.lt.s32.totalorder %s21, 0
      %s305 = scalar_select %p304, %s21, 0
      %s306 = sadd.s32 %s305, %s303
      %s307 = smul.addr %s306, 4
      %s308 = scalar_lea.vmem %s3, %s307
      %s309 = smul.u32 8, %s20
      %s310 = smul.u32 8, %s20
      %p311 = scmp.lt.s32.totalorder %s310, 15
      %s312 = scalar_select %p311, %s310, 15
      %p313 = scmp.lt.s32.totalorder %s21, 0
      %s314 = scalar_select %p313, %s21, 0
      %s315 = sadd.s32 %s314, %s312
      %s316 = smul.addr %s315, 8
      %s317 = scalar_lea.vmem %s4, %s316
      %s318 = smul.u32 8, %s20
      %p320 = scmp.eq.s32.totalorder %s22, 0
      // Predicated region
      $region37: #{residual_block_forward.5} parent=35 // pred_check
        %p321 = pneg %p320
      $region38: #{residual_block_forward.5} parent=35 // pred_check_branch
        %323 = sbr.rel (%p321) target = $region40
      $region39: #{residual_block_forward.5} parent=35 // pred_region
        %324 = vst [vmem:[#allocation2] sm:$0xff] 0.0
        %325 = vst [vmem:[#allocation2 + $0x8] sm:$0xff] 0.0
        %326 = vst [vmem:[#allocation2 + $0x10] sm:$0xff] 0.0
        %327 = vst [vmem:[#allocation2 + $0x18] sm:$0xff] 0.0
        %328 = vst [vmem:[#allocation2 + $0x20] sm:$0xff] 0.0
        %329 = vst [vmem:[#allocation2 + $0x28] sm:$0xff] 0.0
        %330 = vst [vmem:[#allocation2 + $0x30] sm:$0xff] 0.0
        %331 = vst [vmem:[#allocation2 + $0x38] sm:$0xff] 0.0
      $region40: #{residual_block_forward.5} parent=35 // pred_fallthru
        _
      %v332 = vld [vmem:[#allocation2] sm:$0xff]
      %v333 = vld [vmem:[#allocation2 + $0x8] sm:$0xff]
      %v334 = vld [vmem:[#allocation2 + $0x10] sm:$0xff]
      %v335 = vld [vmem:[#allocation2 + $0x18] sm:$0xff]
      %v336 = vld [vmem:[#allocation2 + $0x20] sm:$0xff]
      %v337 = vld [vmem:[#allocation2 + $0x28] sm:$0xff]
      %v338 = vld [vmem:[#allocation2 + $0x30] sm:$0xff]
      %v339 = vld [vmem:[#allocation2 + $0x38] sm:$0xff]
      %v340 = vld [vmem:[%s287] sm:$0xf]
      %v341 = vld [vmem:[%s287 + $0x4] sm:$0xf]
      %v342 = vld [vmem:[%s287 + $0x8] sm:$0xf]
      %v343 = vld [vmem:[%s287 + $0xc] sm:$0xf]
      %v344 = vld [vmem:[%s287 + $0x10] sm:$0xf]
      %v345 = vld [vmem:[%s287 + $0x14] sm:$0xf]
      %v346 = vld [vmem:[%s287 + $0x18] sm:$0xf]
      %v347 = vld [vmem:[%s287 + $0x1c] sm:$0xf]
      %v348 = vld [vmem:[%s296] sm:$0xf]
      %v349 = vld [vmem:[%s296 + $0x4] sm:$0xf]
      %v350 = vld [vmem:[%s296 + $0x8] sm:$0xf]
      %v351 = vld [vmem:[%s296 + $0xc] sm:$0xf]
      %v352 = vld [vmem:[%s296 + $0x10] sm:$0xf]
      %v353 = vld [vmem:[%s296 + $0x14] sm:$0xf]
      %v354 = vld [vmem:[%s296 + $0x18] sm:$0xf]
      %v355 = vld [vmem:[%s296 + $0x1c] sm:$0xf]
      %v356 = vld [vmem:[%s296 + $0x20] sm:$0xf]
      %v357 = vld [vmem:[%s296 + $0x24] sm:$0xf]
      %v358 = vld [vmem:[%s296 + $0x28] sm:$0xf]
      %v359 = vld [vmem:[%s296 + $0x2c] sm:$0xf]
      %v360 = vld [vmem:[%s296 + $0x30] sm:$0xf]
      %v361 = vld [vmem:[%s296 + $0x34] sm:$0xf]
      %v362 = vld [vmem:[%s296 + $0x38] sm:$0xf]
      %v363 = vld [vmem:[%s296 + $0x3c] sm:$0xf]
      %v372 = vunpack.c.l.b16 %v340
      %v373 = vunpack.c.l.b16 %v341
      %v374 = vunpack.c.l.b16 %v342
      %v375 = vunpack.c.l.b16 %v343
      %v376 = vunpack.c.l.b16 %v344
      %v377 = vunpack.c.l.b16 %v345
      %v378 = vunpack.c.l.b16 %v346
      %v379 = vunpack.c.l.b16 %v347
      %v380 = vpack.c.b16 %v373, %v372
      %v381 = vpack.c.b16 %v375, %v374
      %v382 = vpack.c.b16 %v377, %v376
      %v383 = vpack.c.b16 %v379, %v378
      %v404 = vunpack.c.l.b16 %v348
      %v405 = vunpack.c.l.b16 %v349
      %v406 = vunpack.c.l.b16 %v350
      %v407 = vunpack.c.l.b16 %v351
      %v408 = vunpack.c.l.b16 %v352
      %v409 = vunpack.c.l.b16 %v353
      %v410 = vunpack.c.l.b16 %v354
      %v411 = vunpack.c.l.b16 %v355
      %v412 = vunpack.c.l.b16 %v356
      %v413 = vunpack.c.l.b16 %v357
      %v414 = vunpack.c.l.b16 %v358
      %v415 = vunpack.c.l.b16 %v359
      %v416 = vunpack.c.l.b16 %v360
      %v417 = vunpack.c.l.b16 %v361
      %v418 = vunpack.c.l.b16 %v362
      %v419 = vunpack.c.l.b16 %v363
      %v420 = vpack.c.b16 %v405, %v404
      %v421 = vpack.c.b16 %v407, %v406
      %v422 = vpack.c.b16 %v409, %v408
      %v423 = vpack.c.b16 %v411, %v410
      %v424 = vpack.c.b16 %v413, %v412
      %v425 = vpack.c.b16 %v415, %v414
      %v426 = vpack.c.b16 %v417, %v416
      %v427 = vpack.c.b16 %v419, %v418
      %436 = vmatprep.subr.bf16.mxu0 0
      %437 = vmatpush1.bf16.msra.mxu0 %v427
      %438 = vmatprep.subr.bf16.mxu0 0
      %439 = vmatpush1.bf16.msra.mxu0 %v426
      %440 = vmatprep.subr.bf16.mxu0 0
      %441 = vmatpush1.bf16.msra.mxu0 %v425
      %442 = vmatprep.subr.bf16.mxu0 0
      %443 = vmatpush1.bf16.msra.mxu0 %v424
      %444 = vmatprep.subr.bf16.mxu0 0
      %445 = vmatpush1.bf16.msra.mxu0 %v423
      %446 = vmatprep.subr.bf16.mxu0 0
      %447 = vmatpush1.bf16.msra.mxu0 %v422
      %448 = vmatprep.subr.bf16.mxu0 0
      %449 = vmatpush1.bf16.msra.mxu0 %v421
      %450 = vmatprep.subr.bf16.mxu0 0
      %451 = vmatpush1.bf16.msra.mxu0 %v420
      %452 = vmatprep.subr.bf16.mxu0 0
      %453 = vmatpush2.bf16.msra.mxu0 0
      %454 = vmatprep.subr.bf16.mxu0 0
      %455 = vmatpush2.bf16.msra.mxu0 0
      %456 = vmatprep.subr.bf16.mxu0 0
      %457 = vmatpush2.bf16.msra.mxu0 0
      %458 = vmatprep.subr.bf16.mxu0 0
      %459 = vmatpush2.bf16.msra.mxu0 0
      %460 = vmatprep.subr.bf16.mxu0 0
      %461 = vmatpush2.bf16.msra.mxu0 0
      %462 = vmatprep.subr.bf16.mxu0 0
      %463 = vmatpush2.bf16.msra.mxu0 0
      %464 = vmatprep.subr.bf16.mxu0 0
      %465 = vmatpush2.bf16.msra.mxu0 0
      %466 = vmatprep.subr.bf16.mxu0 0
      %467 = vmatpush2.bf16.msra.mxu0 0
      %468 = vmatprep.mubr.bf16.mxu0 0
      %469 = vmatmul.mubr.bf16.gmra.mxu0 %v380
      %v470 = vpop.f32.mrf.mxu0
      %v471 = vadd.f32 0.0, %v470
      %v472 = vpop.f32.mrf.mxu0
      %v473 = vpop.f32.mrf.mxu0
      %v474 = vadd.f32 0.0, %v473
      %v475 = vpop.f32.mrf.mxu0
      %476 = vmatprep.mubr.bf16.mxu0 0
      %477 = vmatmul.mubr.bf16.gmra.mxu0 %v381
      %v478 = vpop.f32.mrf.mxu0
      %v479 = vadd.f32 0.0, %v478
      %v480 = vpop.f32.mrf.mxu0
      %v481 = vpop.f32.mrf.mxu0
      %v482 = vadd.f32 0.0, %v481
      %v483 = vpop.f32.mrf.mxu0
      %484 = vmatprep.mubr.bf16.mxu0 0
      %485 = vmatmul.mubr.bf16.gmra.mxu0 %v382
      %v486 = vpop.f32.mrf.mxu0
      %v487 = vadd.f32 0.0, %v486
      %v488 = vpop.f32.mrf.mxu0
      %v489 = vpop.f32.mrf.mxu0
      %v490 = vadd.f32 0.0, %v489
      %v491 = vpop.f32.mrf.mxu0
      %492 = vmatprep.mubr.bf16.mxu0 0
      %493 = vmatmul.mubr.bf16.gmra.mxu0 %v383
      %v494 = vpop.f32.mrf.mxu0
      %v495 = vadd.f32 0.0, %v494
      %v496 = vpop.f32.mrf.mxu0
      %v497 = vpop.f32.mrf.mxu0
      %v498 = vadd.f32 0.0, %v497
      %v499 = vpop.f32.mrf.mxu0
      %500 = vdwg.mxu0
      %v501 = vadd.f32 %v332, %v471
      %v502 = vadd.f32 %v333, %v474
      %v503 = vadd.f32 %v334, %v479
      %v504 = vadd.f32 %v335, %v482
      %v505 = vadd.f32 %v336, %v487
      %v506 = vadd.f32 %v337, %v490
      %v507 = vadd.f32 %v338, %v495
      %v508 = vadd.f32 %v339, %v498
      %509 = vst [vmem:[#allocation2] sm:$0xff] %v501
      %510 = vst [vmem:[#allocation2 + $0x8] sm:$0xff] %v502
      %511 = vst [vmem:[#allocation2 + $0x10] sm:$0xff] %v503
      %512 = vst [vmem:[#allocation2 + $0x18] sm:$0xff] %v504
      %513 = vst [vmem:[#allocation2 + $0x20] sm:$0xff] %v505
      %514 = vst [vmem:[#allocation2 + $0x28] sm:$0xff] %v506
      %515 = vst [vmem:[#allocation2 + $0x30] sm:$0xff] %v507
      %516 = vst [vmem:[#allocation2 + $0x38] sm:$0xff] %v508
      // Predicated region
      $region41: #{residual_block_forward.5} parent=35 // pred_check
        %p517 = pneg %p320
      $region42: #{residual_block_forward.5} parent=35 // pred_check_branch
        %519 = sbr.rel (%p517) target = $region44
      $region43: #{residual_block_forward.5} parent=35 // pred_region
        %v520 = vld [vmem:[#allocation2] sm:$0xff]
        %v521 = vld [vmem:[#allocation2 + $0x8] sm:$0xff]
        %v522 = vld [vmem:[#allocation2 + $0x10] sm:$0xff]
        %v523 = vld [vmem:[#allocation2 + $0x18] sm:$0xff]
        %v524 = vld [vmem:[#allocation2 + $0x20] sm:$0xff]
        %v525 = vld [vmem:[#allocation2 + $0x28] sm:$0xff]
        %v526 = vld [vmem:[#allocation2 + $0x30] sm:$0xff]
        %v527 = vld [vmem:[#allocation2 + $0x38] sm:$0xff]
        %v528 = vld [vmem:[%s300] sm:$0x1]
        %v530 = vlaneseq
        %v531 = vshrl.u32 %v530, 7
        %v532 = vsub.s32 0, %v531
        %v533 = vrot.slane %v528, %v532
        %v535 = vadd.f32 %v520, %v533
        %v536 = vadd.f32 %v521, %v533
        %v537 = vadd.f32 %v522, %v533
        %v538 = vadd.f32 %v523, %v533
        %v539 = vadd.f32 %v524, %v533
        %v540 = vadd.f32 %v525, %v533
        %v541 = vadd.f32 %v526, %v533
        %v542 = vadd.f32 %v527, %v533
        %v543 = vld [vmem:[%s308] sm:$0xf]
        %v544 = vld [vmem:[%s308 + $0x4] sm:$0xf]
        %v545 = vld [vmem:[%s308 + $0x8] sm:$0xf]
        %v546 = vld [vmem:[%s308 + $0xc] sm:$0xf]
        %v547 = vld [vmem:[%s308 + $0x10] sm:$0xf]
        %v548 = vld [vmem:[%s308 + $0x14] sm:$0xf]
        %v549 = vld [vmem:[%s308 + $0x18] sm:$0xf]
        %v550 = vld [vmem:[%s308 + $0x1c] sm:$0xf]
        %v551 = vunpack.c.l.bf16 %v543
        %v552 = vunpack.c.l.bf16 %v544
        %v553 = vunpack.c.l.bf16 %v545
        %v554 = vunpack.c.l.bf16 %v546
        %v555 = vunpack.c.l.bf16 %v547
        %v556 = vunpack.c.l.bf16 %v548
        %v557 = vunpack.c.l.bf16 %v549
        %v558 = vunpack.c.l.bf16 %v550
        %v559 = vadd.f32 %v535, %v551
        %v560 = vadd.f32 %v536, %v552
        %v561 = vadd.f32 %v537, %v553
        %v562 = vadd.f32 %v538, %v554
        %v563 = vadd.f32 %v539, %v555
        %v564 = vadd.f32 %v540, %v556
        %v565 = vadd.f32 %v541, %v557
        %v566 = vadd.f32 %v542, %v558
        %v567 = vmax.f32 %v559, 0.0
        %v568 = vmax.f32 %v560, 0.0
        %v569 = vmax.f32 %v561, 0.0
        %v570 = vmax.f32 %v562, 0.0
        %v571 = vmax.f32 %v563, 0.0
        %v572 = vmax.f32 %v564, 0.0
        %v573 = vmax.f32 %v565, 0.0
        %v574 = vmax.f32 %v566, 0.0
        %575 = vst [vmem:[%s317] sm:$0xff] %v567
        %576 = vst [vmem:[%s317 + $0x8] sm:$0xff] %v568
        %577 = vst [vmem:[%s317 + $0x10] sm:$0xff] %v569
        %578 = vst [vmem:[%s317 + $0x18] sm:$0xff] %v570
        %579 = vst [vmem:[%s317 + $0x20] sm:$0xff] %v571
        %580 = vst [vmem:[%s317 + $0x28] sm:$0xff] %v572
        %581 = vst [vmem:[%s317 + $0x30] sm:$0xff] %v573
        %582 = vst [vmem:[%s317 + $0x38] sm:$0xff] %v574
      $region44: #{residual_block_forward.5} parent=35 // pred_fallthru
        _
      %s583 = smul.u32 8, %s20
      %p584 = scmp.lt.s32.totalorder %s583, 15
      %s585 = scalar_select %p584, %s583, 15
      %p586 = scmp.lt.s32.totalorder %s21, 0
      %s587 = scalar_select %p586, %s21, 0
      %s588 = sadd.s32 %s587, %s585
      %s589 = smul.addr %s588, 8
      %s590 = scalar_lea.vmem %s4, %s589
      // Predicated region
      $region45: #{residual_block_forward.5} parent=35 // pred_check
        %p591 = pneg %p164
      $region46: #{residual_block_forward.5} parent=35 // pred_check_branch
        %593 = sbr.rel (%p591) target = $region48
      $region47: #{residual_block_forward.5} parent=35 // pred_region
        %s594 = smul.u32 8, %s20
      $region48: #{residual_block_forward.5} parent=35 // pred_fallthru
        _
    $region36: #{residual_block_forward.5} parent=5 // pred_fallthru
      _
    %p595 = scmp.le.s32.totalorder 2, %s10
    // Predicated region
    $region49: #{residual_block_forward.5} parent=5 // pred_check
      %p596 = pneg %p595
    $region50: #{residual_block_forward.5} parent=5 // pred_check_branch
      %598 = sbr.rel (%p596) target = $region52
    $region51: #{residual_block_forward.5} parent=5 // pred_region
      %s599 = ssub.s32 %s10, 2
      // Predicated region
      $region53: #{residual_block_forward.5} parent=51 // pred_check
        %p600 = pneg %p170
      $region54: #{residual_block_forward.5} parent=51 // pred_check_branch
        %602 = sbr.rel (%p600) target = $region56
      $region55: #{residual_block_forward.5} parent=51 // pred_region
        %s603 = smul.u32 8, %s23
        %p604 = scmp.lt.s32.totalorder %s603, 15
        %s605 = scalar_select %p604, %s603, 15
        %p606 = scmp.lt.s32.totalorder %s24, 0
        %s607 = scalar_select %p606, %s24, 0
        %s608 = sadd.s32 %s607, %s605
        %s609 = smul.addr %s608, 8
        %s610 = scalar_lea.vmem %s4, %s609
      $region56: #{residual_block_forward.5} parent=51 // pred_fallthru
        _
    $region52: #{residual_block_forward.5} parent=5 // pred_fallthru
      _
  $region6: #{residual_block_forward.5} parent=0 // loop_footer
    %s14 = sadd.s32 1, %s10
  $region7: #{residual_block_forward.5} parent=0 // loop_footer_branch
    %9 = sbr.rel target = $region3
  $region8: #{residual_block_forward.5} parent=0 // loop_exit
    _

</llo_original>
